<compile_context>
chip_gen: v6e
topology: v6e:2x2x1
jax: 0.10.0
libtpu: 0.0.40
codegen_flags: <defaults>
</compile_context>

<pallas_src>
import jax
import jax.numpy as jnp
from jax.experimental import pallas as pl
from jax.experimental.pallas import tpu as pltpu


def _round_up(x, m):
    return ((x + m - 1) // m) * m


_VMEM_BUDGET = 12 * 1024 * 1024  # bytes; fits v5e's 16 MiB default scoped VMEM


def _choose_tiles(B, D_pad, n_pad, ncls, vmem_budget=_VMEM_BUDGET):
    """Pick (tm, tk, collapse_k) so the double-buffered working set fits VMEM."""
    # M-tile upper bound: never larger than the 8-padded batch; on 2-TensorCore
    # chips (v7x) keep num_m >= 2 once the batch is big enough so the
    # "parallel" M axis actually uses the second core.
    tm_cap = _round_up(B, 8)
    if B >= 16:
        tm_cap = min(tm_cap, _round_up(B, 16) // 2)
    tm_cap = min(tm_cap, 512)

    def shrink(tm, need_fn):
        while tm > 8 and need_fn(tm) > vmem_budget:
            tm = max(8, ((tm // 2) + 7) // 8 * 8)
        return tm

    wcls_full = D_pad * n_pad * 2  # full bf16 classifier weight

    # Path 1: whole classifier weight resident in VMEM -> 1-D grid, no
    # accumulator scratch, no init/finalize branches.
    if 2 * wcls_full <= vmem_budget // 2:
        need = lambda tm: (2 * tm * D_pad * 4      # x tile (f32, double-buffered)
                           + 2 * wcls_full         # w_cls (2 bufs, fetched once)
                           + 2 * D_pad * 4         # fused broadcast constant
                           + 2 * tm * ncls * 4)    # output tile
        return shrink(tm_cap, need), D_pad, True

    # Path 2: K-tiled reduction with an f32 VMEM accumulator.
    for tk in (1024, 512, 256, 128):
        if D_pad % tk:
            continue
        need = lambda tm, tk=tk: (2 * tm * tk * 4 + 2 * tk * n_pad * 2
                                  + 2 * tk * 4 + tm * n_pad * 4
                                  + 2 * tm * ncls * 4)
        tm = shrink(tm_cap, need)
        if need(tm) <= vmem_budget:
            return tm, tk, False
    return 8, 128, False


def _remap_store(logits, osumt_ref, o_ref):
    """out[:, c] = sum_n logits[:, n] * out_sum[n, c]; single lane-dense-ish store."""
    cols = [jnp.sum(logits * osumt_ref[c:c + 1, :], axis=-1, keepdims=True)
            for c in range(osumt_ref.shape[0])]          # static, tiny (ncls == 2)
    o_ref[...] = jnp.concatenate(cols, axis=-1)


def _reprogram_kernel_fullk(x_ref, comb_ref, wcls_ref, osumt_ref, o_ref):
    """Grid = (num_m,); whole reduction dim + classifier weight in VMEM."""
    mi = jnp.tanh(x_ref[...] + comb_ref[...])            # VPU + EUP
    logits = jnp.dot(mi.astype(jnp.bfloat16), wcls_ref[...],
                     preferred_element_type=jnp.float32)  # MXU, f32 acc
    _remap_store(logits, osumt_ref, o_ref)


def _reprogram_kernel_tiledk(x_ref, comb_ref, wcls_ref, osumt_ref, o_ref, acc_ref):
    """Grid = (num_m, num_k); K is the reduction axis (large-D fallback)."""
    k = pl.program_id(1)

    @pl.when(k == 0)
    def _():
        acc_ref[...] = jnp.zeros_like(acc_ref)

    mi = jnp.tanh(x_ref[...] + comb_ref[...])
    acc_ref[...] += jnp.dot(mi.astype(jnp.bfloat16), wcls_ref[...],
                            preferred_element_type=jnp.float32)

    @pl.when(k == pl.num_programs(1) - 1)
    def _():
        _remap_store(acc_ref[...], osumt_ref, o_ref)


def reprogram_forward(input_d, bkg, slt_pix, weight, w_cls, out_sum):
    B, C, H, W = input_d.shape
    D = C * H * W
    N = w_cls.shape[1]
    ncls = out_sum.shape[1]

    D_pad = _round_up(D, 128)
    n_pad = _round_up(N, 128)
    tm, tk, collapse_k = _choose_tiles(B, D_pad, n_pad, ncls)
    B_pad = _round_up(B, tm)
    num_m = B_pad // tm

    # Lane-dense (B, D) flatten; row-major NCHW flatten matches torch .view/.flatten.
    # Zero padding is exact: padded K columns multiply zero-padded w_cls rows,
    # padded N columns multiply zero-padded out_sum rows, padded B rows are
    # sliced off below.
    x = jnp.pad(input_d.reshape(B, D), ((0, B_pad - B), (0, D_pad - D)))
    # Fold the three frozen broadcast params into one stream, once, in the wrapper.
    comb = jnp.pad((bkg + slt_pix * weight).reshape(1, D),
                   ((0, 0), (0, D_pad - D)))
    # Frozen classifier weight: bf16 for the MXU, zero-padded to (D_pad, n_pad).
    wcls_p = jnp.pad(w_cls, ((0, D_pad - D), (0, n_pad - N))).astype(jnp.bfloat16)
    # out_sum transposed to (ncls, n_pad) so the remap is a lane-dense VPU reduce.
    osum_t = jnp.pad(out_sum, ((0, n_pad - N), (0, 0))).T.astype(jnp.float32)

    if collapse_k:
        kernel = _reprogram_kernel_fullk
        grid_spec = pltpu.PrefetchScalarGridSpec(
            num_scalar_prefetch=0,
            grid=(num_m,),
            in_specs=[
                pl.BlockSpec((tm, D_pad), lambda m: (m, 0)),       # input (flattened)
                pl.BlockSpec((1, D_pad), lambda m: (0, 0)),        # bkg + slt*weight
                pl.BlockSpec((D_pad, n_pad), lambda m: (0, 0)),    # w_cls (bf16)
                pl.BlockSpec((ncls, n_pad), lambda m: (0, 0)),     # out_sum^T
            ],
            out_specs=pl.BlockSpec((tm, ncls), lambda m: (m, 0)),
        )
        semantics = ("parallel",)
    else:
        kernel = _reprogram_kernel_tiledk
        num_k = D_pad // tk
        grid_spec = pltpu.PrefetchScalarGridSpec(
            num_scalar_prefetch=0,
            grid=(num_m, num_k),
            in_specs=[
                pl.BlockSpec((tm, tk), lambda m, k: (m, k)),
                pl.BlockSpec((1, tk), lambda m, k: (0, k)),
                pl.BlockSpec((tk, n_pad), lambda m, k: (k, 0)),
                pl.BlockSpec((ncls, n_pad), lambda m, k: (0, 0)),
            ],
            out_specs=pl.BlockSpec((tm, ncls), lambda m, k: (m, 0)),
            scratch_shapes=[pltpu.VMEM((tm, n_pad), jnp.float32)],
        )
        semantics = ("parallel", "arbitrary")

    out = pl.pallas_call(
        kernel,
        out_shape=jax.ShapeDtypeStruct((B_pad, ncls), jnp.float32),
        grid_spec=grid_spec,
        compiler_params=pltpu.CompilerParams(dimension_semantics=semantics),
    )(x, comb, wcls_p, osum_t)
    return out[:B]


if __name__ == "__main__":
    B, C, H, W = 2, 3, 16, 16          # D = 768 = 6 * 128 (lane-dense)
    NUM_CLASSES = 1000

    key = jax.random.PRNGKey(0)
    k = jax.random.split(key, 6)

    # input to forward()
    input_d = jax.random.normal(k[0], (B, C, H, W), jnp.float32)

    # self.bkg = 2 * image - 1  (image in [0, 1]; synthesized deterministically)
    img = jax.random.uniform(k[1], (C, H, W), jnp.float32)
    bkg = 2.0 * img - 1.0

    # self.weight ~ N(0, 1) of shape input_size
    weight = jax.random.normal(k[2], (C, H, W), jnp.float32)

    # self.slt_pix: blur/selection mask loaded from npy in the original
    slt_pix = (jax.random.uniform(k[3], (C, H, W), jnp.float32) > 0.5).astype(jnp.float32)

    # self.out_sum: (1000, 2) one-hot rows, 500 labels per output class, shuffled
    perm = jax.random.permutation(k[4], NUM_CLASSES)
    col0 = (perm < 500).astype(jnp.float32)
    out_sum = jnp.stack([col0, 1.0 - col0], axis=1)

    # stand-in frozen classifier weights (see TODO(synk) above)
    w_cls = jax.random.normal(k[5], (C * H * W, NUM_CLASSES), jnp.float32) * 0.02

    out = reprogram_forward(input_d, bkg, slt_pix, weight, w_cls, out_sum)
    out = jax.block_until_ready(out)

    # Pure-JAX reference mirroring the kernel's numerics (bf16 MXU operands, f32 acc).
    mi_ref = jnp.tanh(input_d + bkg[None] + slt_pix[None] * weight[None]).reshape(B, -1)
    out1_ref = jnp.dot(mi_ref.astype(jnp.bfloat16), w_cls.astype(jnp.bfloat16),
                       preferred_element_type=jnp.float32)
    ref_out = jnp.dot(out1_ref, out_sum, preferred_element_type=jnp.float32)

    assert out.shape == (B, 2)
    assert jnp.allclose(out, ref_out, rtol=1e-2, atol=1e-2), (out, ref_out)

    print("KERNEL_OK")
</pallas_src>

<mosaic_0001>
module attributes {stable_mosaic.version = 11 : i64} {
  func.func @_reprogram_kernel_fullk(%arg0: i32, %arg1: memref<8x768xf32, #tpu.memory_space<vmem>>, %arg2: memref<1x768xf32, #tpu.memory_space<vmem>>, %arg3: memref<768x1024xbf16, #tpu.memory_space<vmem>>, %arg4: memref<2x1024xf32, #tpu.memory_space<vmem>>, %arg5: memref<8x2xf32, #tpu.memory_space<vmem>>) attributes {dimension_semantics = [#tpu.dimension_semantics<parallel>], iteration_bounds = array<i64: 1>, scalar_prefetch = 0 : i64, scratch_operands = 0 : i64, tpu.core_type = #tpu.core_type<tc>, window_params = [{transform_indices = @transform_0, window_bounds = array<i64: 8, 768>}, {pipeline_mode = #tpu.pipeline_mode<synchronous>, transform_indices = @transform_1, window_bounds = array<i64: 1, 768>}, {pipeline_mode = #tpu.pipeline_mode<synchronous>, transform_indices = @transform_2, window_bounds = array<i64: 768, 1024>}, {pipeline_mode = #tpu.pipeline_mode<synchronous>, transform_indices = @transform_3, window_bounds = array<i64: 2, 1024>}, {transform_indices = @transform_4, window_bounds = array<i64: 8, 2>}]} {
    %c0 = arith.constant 0 : index
    %c0_0 = arith.constant 0 : index
    %0 = vector.load %arg1[%c0, %c0_0] : memref<8x768xf32, #tpu.memory_space<vmem>>, vector<8x768xf32>
    %c0_1 = arith.constant 0 : index
    %c0_2 = arith.constant 0 : index
    %1 = vector.load %arg2[%c0_1, %c0_2] : memref<1x768xf32, #tpu.memory_space<vmem>>, vector<1x768xf32>
    %2 = vector.broadcast %1 : vector<1x768xf32> to vector<8x768xf32>
    %3 = arith.addf %0, %2 : vector<8x768xf32>
    %4 = math.tanh %3 : vector<8x768xf32>
    %5 = arith.truncf %4 : vector<8x768xf32> to vector<8x768xbf16>
    %c0_3 = arith.constant 0 : index
    %c0_4 = arith.constant 0 : index
    %6 = vector.load %arg3[%c0_3, %c0_4] : memref<768x1024xbf16, #tpu.memory_space<vmem>>, vector<768x1024xbf16>
    %cst = arith.constant dense<0.000000e+00> : vector<8x1024xf32>
    %7 = tpu.matmul %5, %6, %cst {dimension_numbers = #tpu.dot_dimension_numbers<[1], [0], [0], [1], [0, 0, 1, 1], [], []>} : vector<8x768xbf16>, vector<768x1024xbf16>, vector<8x1024xf32> -> vector<8x1024xf32>
    %c0_5 = arith.constant 0 : index
    %c0_6 = arith.constant 0 : index
    %8 = vector.load %arg4[%c0_5, %c0_6] : memref<2x1024xf32, #tpu.memory_space<vmem>>, vector<1x1024xf32>
    %9 = vector.broadcast %8 : vector<1x1024xf32> to vector<8x1024xf32>
    %10 = arith.mulf %7, %9 : vector<8x1024xf32>
    %cst_7 = arith.constant dense<0.000000e+00> : vector<8xf32>
    %11 = vector.multi_reduction <add>, %10, %cst_7 [1] : vector<8x1024xf32> to vector<8xf32>
    %12 = vector.shape_cast %11 : vector<8xf32> to vector<8x1xf32>
    %c1 = arith.constant 1 : index
    %c0_8 = arith.constant 0 : index
    %13 = vector.load %arg4[%c1, %c0_8] : memref<2x1024xf32, #tpu.memory_space<vmem>>, vector<1x1024xf32>
    %14 = vector.broadcast %13 : vector<1x1024xf32> to vector<8x1024xf32>
    %15 = arith.mulf %7, %14 : vector<8x1024xf32>
    %cst_9 = arith.constant dense<0.000000e+00> : vector<8xf32>
    %16 = vector.multi_reduction <add>, %15, %cst_9 [1] : vector<8x1024xf32> to vector<8xf32>
    %17 = vector.shape_cast %16 : vector<8xf32> to vector<8x1xf32>
    %18 = tpu.concatenate %12, %17 in 1 : vector<8x1xf32>, vector<8x1xf32> -> vector<8x2xf32>
    %c0_10 = arith.constant 0 : index
    %c0_11 = arith.constant 0 : index
    %19 = vector.load %arg5[%c0_10, %c0_11] : memref<8x2xf32, #tpu.memory_space<vmem>>, vector<8x2xf32>
    tpu.vector_store %arg5[%c0_10, %c0_11], %18 {strides = array<i32>} : memref<8x2xf32, #tpu.memory_space<vmem>>, vector<8x2xf32>,
    return
  }
  func.func @transform_0(%arg0: i32) -> (i32, i32) {
    %c0_i32 = arith.constant 0 : i32
    %c0_i32_0 = arith.constant 0 : i32
    return %arg0, %c0_i32 : i32, i32
  }
  func.func @transform_1(%arg0: i32) -> (i32, i32) {
    %c0_i32 = arith.constant 0 : i32
    %c0_i32_0 = arith.constant 0 : i32
    %c0_i32_1 = arith.constant 0 : i32
    return %c0_i32, %c0_i32_0 : i32, i32
  }
  func.func @transform_2(%arg0: i32) -> (i32, i32) {
    %c0_i32 = arith.constant 0 : i32
    %c0_i32_0 = arith.constant 0 : i32
    %c0_i32_1 = arith.constant 0 : i32
    return %c0_i32, %c0_i32_0 : i32, i32
  }
  func.func @transform_3(%arg0: i32) -> (i32, i32) {
    %c0_i32 = arith.constant 0 : i32
    %c0_i32_0 = arith.constant 0 : i32
    %c0_i32_1 = arith.constant 0 : i32
    return %c0_i32, %c0_i32_0 : i32, i32
  }
  func.func @transform_4(%arg0: i32) -> (i32, i32) {
    %c0_i32 = arith.constant 0 : i32
    %c0_i32_0 = arith.constant 0 : i32
    return %arg0, %c0_i32 : i32, i32
  }
}

</mosaic_0001>

<llo_original>
// kernel: tpu_custom_call.1
$region0: #{tpu_custom_call.1}
  #allocation0 [shape = 'u32[]', space=smem, size = 0x4, offset = 0x4, fixed_abs, tag = 'smem constant byte address 0x4 - core index']
  #allocation1 [shape = 'u32[144,128]{1,0:T(1,128)}', space=vmem, size = 0x12000, scoped, tag = 'internal scratch']
  %s0 = inlined_call_operand.hbm [shape: f32[8,768], index: 0, kind: input, shape index: {}]
  %s1 = inlined_call_operand.hbm [shape: f32[1,768], index: 1, kind: input, shape index: {}]
  %s2 = inlined_call_operand.hbm [shape: bf16[768,1024], index: 2, kind: input, shape index: {}]
  %s3 = inlined_call_operand.hbm [shape: f32[2,1024], index: 3, kind: input, shape index: {}]
  %s4 = inlined_call_operand.vmem [shape: f32[8,2], index: 4, kind: output, shape index: {}]
  %s5 = sld [smem:[#allocation0]]
  $region42: #{tpu_custom_call.1} parent=0
    _
  %s7 = ssub.s32 1, %s5
  %s8 = scalar_select 0, %s7, %s5
  $region1: #{tpu_custom_call.1} parent=0
    #allocation2 [shape = 'u8[24576]{0}', space=vmem, size = 0x6000, scoped, tag = 'input window, operand 0, single buffered']
    #allocation3 [shape = 's32[1]{0}', space=sflag, size = 0x4, scoped, tag = 'scoped memory for tpu_custom_call.1']
    #allocation4 [shape = 'u8[3072]{0}', space=vmem, size = 0xc00, scoped, tag = 'input window, operand 1, single buffered']
    #allocation5 [shape = 's32[1]{0}', space=sflag, size = 0x4, scoped, tag = 'scoped memory for tpu_custom_call.1']
    #allocation6 [shape = 'u8[1572864]{0}', space=vmem, size = 0x180000, scoped, tag = 'input window, operand 2, single buffered']
    #allocation7 [shape = 'u8[8192]{0}', space=vmem, size = 0x2000, scoped, tag = 'input window, operand 3, single buffered']
    #allocation8 [shape = 's32[1]{0}', space=sflag, size = 0x4, scoped, tag = 'scoped memory for tpu_custom_call.1']
    %9 = vsyncpa [#allocation3], 0
    %10 = vsyncpa [#allocation5], 0
    %11 = vsyncpa [#allocation8], 0
    // Predicated region
    $region2: #{tpu_custom_call.1} parent=1 // pred_check
      _
    $region3: #{tpu_custom_call.1} parent=1 // pred_check_branch
      %13 = sbr.rel (0) target = $region5
    $region4: #{tpu_custom_call.1} parent=1 // pred_region
      %s15 = ssub.s32 768, 768
      %16 = vsyncadd [#allocation3], %s15
      %s18 = sshll.u32 [#allocation2], 4
      %s19 = int_to_ptr.vmem [resolvable:$true] %s18
      %21 = dma.hbm_to_vmem [thread:$0]  %s0, 768, %s19, [#allocation3]
    $region5: #{tpu_custom_call.1} parent=1 // pred_fallthru
      _
    // Predicated region
    $region6: #{tpu_custom_call.1} parent=1 // pred_check
      _
    $region7: #{tpu_custom_call.1} parent=1 // pred_check_branch
      %23 = sbr.rel (0) target = $region9
    $region8: #{tpu_custom_call.1} parent=1 // pred_region
      %s25 = ssub.s32 96, 96
      %26 = vsyncadd [#allocation5], %s25
      %s28 = sshll.u32 [#allocation4], 4
      %s29 = int_to_ptr.vmem [resolvable:$true] %s28
      %31 = dma.hbm_to_vmem [thread:$0]  %s1, 96, %s29, [#allocation5]
    $region9: #{tpu_custom_call.1} parent=1 // pred_fallthru
      _
    // Predicated region
    $region10: #{tpu_custom_call.1} parent=1 // pred_check
      _
    $region11: #{tpu_custom_call.1} parent=1 // pred_check_branch
      %33 = sbr.rel (0) target = $region13
    $region12: #{tpu_custom_call.1} parent=1 // pred_region
      %s35 = ssub.s32 49152, 49152
      %36 = vsyncadd [#allocation5], %s35
      %s37 = sshll.u32 [#allocation6], 4
      %s38 = int_to_ptr.vmem [resolvable:$true] %s37
      %43 = dma.hbm_to_vmem [thread:$0]  %s2, 49152, %s38, [#allocation5], 512, 512, 32
    $region13: #{tpu_custom_call.1} parent=1 // pred_fallthru
      _
    // Predicated region
    $region14: #{tpu_custom_call.1} parent=1 // pred_check
      _
    $region15: #{tpu_custom_call.1} parent=1 // pred_check_branch
      %45 = sbr.rel (0) target = $region17
    $region16: #{tpu_custom_call.1} parent=1 // pred_region
      %s47 = ssub.s32 256, 256
      %48 = vsyncadd [#allocation8], %s47
      %s50 = sshll.u32 [#allocation7], 4
      %s51 = int_to_ptr.vmem [resolvable:$true] %s50
      %53 = dma.hbm_to_vmem [thread:$0]  %s3, 256, %s51, [#allocation8]
    $region17: #{tpu_custom_call.1} parent=1 // pred_fallthru
      _
    // Predicated region
    $region18: #{tpu_custom_call.1} parent=1 // pred_check
      _
    $region19: #{tpu_custom_call.1} parent=1 // pred_check_branch
      %55 = sbr.rel (0) target = $region21
    $region20: #{tpu_custom_call.1} parent=1 // pred_region
      %56 = dma.done [#allocation3], 768
    $region21: #{tpu_custom_call.1} parent=1 // pred_fallthru
      _
    // Predicated region
    $region22: #{tpu_custom_call.1} parent=1 // pred_check
      _
    $region23: #{tpu_custom_call.1} parent=1 // pred_check_branch
      %58 = sbr.rel (0) target = $region25
    $region24: #{tpu_custom_call.1} parent=1 // pred_region
      %59 = dma.done [#allocation5], 96
    $region25: #{tpu_custom_call.1} parent=1 // pred_fallthru
      _
    // Predicated region
    $region26: #{tpu_custom_call.1} parent=1 // pred_check
      _
    $region27: #{tpu_custom_call.1} parent=1 // pred_check_branch
      %61 = sbr.rel (0) target = $region29
    $region28: #{tpu_custom_call.1} parent=1 // pred_region
      %62 = dma.done [#allocation5], 49152
    $region29: #{tpu_custom_call.1} parent=1 // pred_fallthru
      _
    // Predicated region
    $region30: #{tpu_custom_call.1} parent=1 // pred_check
      _
    $region31: #{tpu_custom_call.1} parent=1 // pred_check_branch
      %64 = sbr.rel (0) target = $region33
    $region32: #{tpu_custom_call.1} parent=1 // pred_region
      %65 = dma.done [#allocation8], 256
    $region33: #{tpu_custom_call.1} parent=1 // pred_fallthru
      _
    %v66 = vld [vmem:[#allocation2] sm:$0xff]
    %v67 = vld [vmem:[#allocation2 + $0x8] sm:$0xff]
    %v68 = vld [vmem:[#allocation2 + $0x10] sm:$0xff]
    %v69 = vld [vmem:[#allocation2 + $0x18] sm:$0xff]
    %v70 = vld [vmem:[#allocation2 + $0x20] sm:$0xff]
    %v71 = vld [vmem:[#allocation2 + $0x28] sm:$0xff]
    %v72 = vld [vmem:[#allocation4] sm:$0x3f]
    %v74 = vlaneseq
    %v75 = vshrl.u32 %v74, 7
    %v76 = vsub.s32 0, %v75
    %v77 = vrot.slane %v72, %v76
    %v78 = vlaneseq
    %v79 = vshrl.u32 %v78, 7
    %v80 = vsub.s32 1, %v79
    %v81 = vrot.slane %v72, %v80
    %v82 = vlaneseq
    %v83 = vshrl.u32 %v82, 7
    %v84 = vsub.s32 2, %v83
    %v85 = vrot.slane %v72, %v84
    %v86 = vlaneseq
    %v87 = vshrl.u32 %v86, 7
    %v88 = vsub.s32 3, %v87
    %v89 = vrot.slane %v72, %v88
    %v90 = vlaneseq
    %v91 = vshrl.u32 %v90, 7
    %v92 = vsub.s32 4, %v91
    %v93 = vrot.slane %v72, %v92
    %v94 = vlaneseq
    %v95 = vshrl.u32 %v94, 7
    %v96 = vsub.s32 5, %v95
    %v97 = vrot.slane %v72, %v96
    %v104 = vadd.f32 %v66, %v77
    %v105 = vadd.f32 %v67, %v81
    %v106 = vadd.f32 %v68, %v85
    %v107 = vadd.f32 %v69, %v89
    %v108 = vadd.f32 %v70, %v93
    %v109 = vadd.f32 %v71, %v97
    %v110 = vtanh.pop %v104
    %v111 = vtanh.pop %v105
    %v112 = vtanh.pop %v106
    %v113 = vtanh.pop %v107
    %v114 = vtanh.pop %v108
    %v115 = vtanh.pop %v109
    %v116 = vpack.c.bf16 %v110, %v110
    %v117 = vpack.c.bf16 %v111, %v111
    %v118 = vpack.c.bf16 %v112, %v112
    %v119 = vpack.c.bf16 %v113, %v113
    %v120 = vpack.c.bf16 %v114, %v114
    %v121 = vpack.c.bf16 %v115, %v115
    %v122 = vld [vmem:[#allocation6] sm:$0xff]
    %v123 = vld [vmem:[#allocation6 + $0x8] sm:$0xff]
    %v124 = vld [vmem:[#allocation6 + $0x10] sm:$0xff]
    %v125 = vld [vmem:[#allocation6 + $0x18] sm:$0xff]
    %v126 = vld [vmem:[#allocation6 + $0x20] sm:$0xff]
    %v127 = vld [vmem:[#allocation6 + $0x28] sm:$0xff]
    %v128 = vld [vmem:[#allocation6 + $0x30] sm:$0xff]
    %v129 = vld [vmem:[#allocation6 + $0x38] sm:$0xff]
    %v130 = vld [vmem:[#allocation6 + $0x40] sm:$0xff]
    %v131 = vld [vmem:[#allocation6 + $0x48] sm:$0xff]
    %v132 = vld [vmem:[#allocation6 + $0x50] sm:$0xff]
    %v133 = vld [vmem:[#allocation6 + $0x58] sm:$0xff]
    %v134 = vld [vmem:[#allocation6 + $0x60] sm:$0xff]
    %v135 = vld [vmem:[#allocation6 + $0x68] sm:$0xff]
    %v136 = vld [vmem:[#allocation6 + $0x70] sm:$0xff]
    %v137 = vld [vmem:[#allocation6 + $0x78] sm:$0xff]
    %v138 = vld [vmem:[#allocation6 + $0x80] sm:$0xff]
    %v139 = vld [vmem:[#allocation6 + $0x88] sm:$0xff]
    %v140 = vld [vmem:[#allocation6 + $0x90] sm:$0xff]
    %v141 = vld [vmem:[#allocation6 + $0x98] sm:$0xff]
    %v142 = vld [vmem:[#allocation6 + $0xa0] sm:$0xff]
    %v143 = vld [vmem:[#allocation6 + $0xa8] sm:$0xff]
    %v144 = vld [vmem:[#allocation6 + $0xb0] sm:$0xff]
    %v145 = vld [vmem:[#allocation6 + $0xb8] sm:$0xff]
    %v146 = vld [vmem:[#allocation6 + $0xc0] sm:$0xff]
    %v147 = vld [vmem:[#allocation6 + $0xc8] sm:$0xff]
    %v148 = vld [vmem:[#allocation6 + $0xd0] sm:$0xff]
    %v149 = vld [vmem:[#allocation6 + $0xd8] sm:$0xff]
    %v150 = vld [vmem:[#allocation6 + $0xe0] sm:$0xff]
    %v151 = vld [vmem:[#allocation6 + $0xe8] sm:$0xff]
    %v152 = vld [vmem:[#allocation6 + $0xf0] sm:$0xff]
    %v153 = vld [vmem:[#allocation6 + $0xf8] sm:$0xff]
    %v154 = vld [vmem:[#allocation6 + $0x100] sm:$0xff]
    %v155 = vld [vmem:[#allocation6 + $0x108] sm:$0xff]
    %v156 = vld [vmem:[#allocation6 + $0x110] sm:$0xff]
    %v157 = vld [vmem:[#allocation6 + $0x118] sm:$0xff]
    %v158 = vld [vmem:[#allocation6 + $0x120] sm:$0xff]
    %v159 = vld [vmem:[#allocation6 + $0x128] sm:$0xff]
    %v160 = vld [vmem:[#allocation6 + $0x130] sm:$0xff]
    %v161 = vld [vmem:[#allocation6 + $0x138] sm:$0xff]
    %v162 = vld [vmem:[#allocation6 + $0x140] sm:$0xff]
    %v163 = vld [vmem:[#allocation6 + $0x148] sm:$0xff]
    %v164 = vld [vmem:[#allocation6 + $0x150] sm:$0xff]
    %v165 = vld [vmem:[#allocation6 + $0x158] sm:$0xff]
    %v166 = vld [vmem:[#allocation6 + $0x160] sm:$0xff]
    %v167 = vld [vmem:[#allocation6 + $0x168] sm:$0xff]
    %v168 = vld [vmem:[#allocation6 + $0x170] sm:$0xff]
    %v169 = vld [vmem:[#allocation6 + $0x178] sm:$0xff]
    %v170 = vld [vmem:[#allocation6 + $0x180] sm:$0xff]
    %v171 = vld [vmem:[#allocation6 + $0x188] sm:$0xff]
    %v172 = vld [vmem:[#allocation6 + $0x190] sm:$0xff]
    %v173 = vld [vmem:[#allocation6 + $0x198] sm:$0xff]
    %v174 = vld [vmem:[#allocation6 + $0x1a0] sm:$0xff]
    %v175 = vld [vmem:[#allocation6 + $0x1a8] sm:$0xff]
    %v176 = vld [vmem:[#allocation6 + $0x1b0] sm:$0xff]
    %v177 = vld [vmem:[#allocation6 + $0x1b8] sm:$0xff]
    %v178 = vld [vmem:[#allocation6 + $0x1c0] sm:$0xff]
    %v179 = vld [vmem:[#allocation6 + $0x1c8] sm:$0xff]
    %v180 = vld [vmem:[#allocation6 + $0x1d0] sm:$0xff]
    %v181 = vld [vmem:[#allocation6 + $0x1d8] sm:$0xff]
    %v182 = vld [vmem:[#allocation6 + $0x1e0] sm:$0xff]
    %v183 = vld [vmem:[#allocation6 + $0x1e8] sm:$0xff]
    %v184 = vld [vmem:[#allocation6 + $0x1f0] sm:$0xff]
    %v185 = vld [vmem:[#allocation6 + $0x1f8] sm:$0xff]
    %v186 = vld [vmem:[#allocation6 + $0x200] sm:$0xff]
    %v187 = vld [vmem:[#allocation6 + $0x208] sm:$0xff]
    %v188 = vld [vmem:[#allocation6 + $0x210] sm:$0xff]
    %v189 = vld [vmem:[#allocation6 + $0x218] sm:$0xff]
    %v190 = vld [vmem:[#allocation6 + $0x220] sm:$0xff]
    %v191 = vld [vmem:[#allocation6 + $0x228] sm:$0xff]
    %v192 = vld [vmem:[#allocation6 + $0x230] sm:$0xff]
    %v193 = vld [vmem:[#allocation6 + $0x238] sm:$0xff]
    %v194 = vld [vmem:[#allocation6 + $0x240] sm:$0xff]
    %v195 = vld [vmem:[#allocation6 + $0x248] sm:$0xff]
    %v196 = vld [vmem:[#allocation6 + $0x250] sm:$0xff]
    %v197 = vld [vmem:[#allocation6 + $0x258] sm:$0xff]
    %v198 = vld [vmem:[#allocation6 + $0x260] sm:$0xff]
    %v199 = vld [vmem:[#allocation6 + $0x268] sm:$0xff]
    %v200 = vld [vmem:[#allocation6 + $0x270] sm:$0xff]
    %v201 = vld [vmem:[#allocation6 + $0x278] sm:$0xff]
    %v202 = vld [vmem:[#allocation6 + $0x280] sm:$0xff]
    %v203 = vld [vmem:[#allocation6 + $0x288] sm:$0xff]
    %v204 = vld [vmem:[#allocation6 + $0x290] sm:$0xff]
    %v205 = vld [vmem:[#allocation6 + $0x298] sm:$0xff]
    %v206 = vld [vmem:[#allocation6 + $0x2a0] sm:$0xff]
    %v207 = vld [vmem:[#allocation6 + $0x2a8] sm:$0xff]
    %v208 = vld [vmem:[#allocation6 + $0x2b0] sm:$0xff]
    %v209 = vld [vmem:[#allocation6 + $0x2b8] sm:$0xff]
    %v210 = vld [vmem:[#allocation6 + $0x2c0] sm:$0xff]
    %v211 = vld [vmem:[#allocation6 + $0x2c8] sm:$0xff]
    %v212 = vld [vmem:[#allocation6 + $0x2d0] sm:$0xff]
    %v213 = vld [vmem:[#allocation6 + $0x2d8] sm:$0xff]
    %v214 = vld [vmem:[#allocation6 + $0x2e0] sm:$0xff]
    %v215 = vld [vmem:[#allocation6 + $0x2e8] sm:$0xff]
    %v216 = vld [vmem:[#allocation6 + $0x2f0] sm:$0xff]
    %v217 = vld [vmem:[#allocation6 + $0x2f8] sm:$0xff]
    %v218 = vld [vmem:[#allocation6 + $0x300] sm:$0xff]
    %v219 = vld [vmem:[#allocation6 + $0x308] sm:$0xff]
    %v220 = vld [vmem:[#allocation6 + $0x310] sm:$0xff]
    %v221 = vld [vmem:[#allocation6 + $0x318] sm:$0xff]
    %v222 = vld [vmem:[#allocation6 + $0x320] sm:$0xff]
    %v223 = vld [vmem:[#allocation6 + $0x328] sm:$0xff]
    %v224 = vld [vmem:[#allocation6 + $0x330] sm:$0xff]
    %v225 = vld [vmem:[#allocation6 + $0x338] sm:$0xff]
    %v226 = vld [vmem:[#allocation6 + $0x340] sm:$0xff]
    %v227 = vld [vmem:[#allocation6 + $0x348] sm:$0xff]
    %v228 = vld [vmem:[#allocation6 + $0x350] sm:$0xff]
    %v229 = vld [vmem:[#allocation6 + $0x358] sm:$0xff]
    %v230 = vld [vmem:[#allocation6 + $0x360] sm:$0xff]
    %v231 = vld [vmem:[#allocation6 + $0x368] sm:$0xff]
    %v232 = vld [vmem:[#allocation6 + $0x370] sm:$0xff]
    %v233 = vld [vmem:[#allocation6 + $0x378] sm:$0xff]
    %v234 = vld [vmem:[#allocation6 + $0x380] sm:$0xff]
    %v235 = vld [vmem:[#allocation6 + $0x388] sm:$0xff]
    %v236 = vld [vmem:[#allocation6 + $0x390] sm:$0xff]
    %v237 = vld [vmem:[#allocation6 + $0x398] sm:$0xff]
    %v238 = vld [vmem:[#allocation6 + $0x3a0] sm:$0xff]
    %v239 = vld [vmem:[#allocation6 + $0x3a8] sm:$0xff]
    %v240 = vld [vmem:[#allocation6 + $0x3b0] sm:$0xff]
    %v241 = vld [vmem:[#allocation6 + $0x3b8] sm:$0xff]
    %v242 = vld [vmem:[#allocation6 + $0x3c0] sm:$0xff]
    %v243 = vld [vmem:[#allocation6 + $0x3c8] sm:$0xff]
    %v244 = vld [vmem:[#allocation6 + $0x3d0] sm:$0xff]
    %v245 = vld [vmem:[#allocation6 + $0x3d8] sm:$0xff]
    %v246 = vld [vmem:[#allocation6 + $0x3e0] sm:$0xff]
    %v247 = vld [vmem:[#allocation6 + $0x3e8] sm:$0xff]
    %v248 = vld [vmem:[#allocation6 + $0x3f0] sm:$0xff]
    %v249 = vld [vmem:[#allocation6 + $0x3f8] sm:$0xff]
    %v250 = vld [vmem:[#allocation6 + $0x400] sm:$0xff]
    %v251 = vld [vmem:[#allocation6 + $0x408] sm:$0xff]
    %v252 = vld [vmem:[#allocation6 + $0x410] sm:$0xff]
    %v253 = vld [vmem:[#allocation6 + $0x418] sm:$0xff]
    %v254 = vld [vmem:[#allocation6 + $0x420] sm:$0xff]
    %v255 = vld [vmem:[#allocation6 + $0x428] sm:$0xff]
    %v256 = vld [vmem:[#allocation6 + $0x430] sm:$0xff]
    %v257 = vld [vmem:[#allocation6 + $0x438] sm:$0xff]
    %v258 = vld [vmem:[#allocation6 + $0x440] sm:$0xff]
    %v259 = vld [vmem:[#allocation6 + $0x448] sm:$0xff]
    %v260 = vld [vmem:[#allocation6 + $0x450] sm:$0xff]
    %v261 = vld [vmem:[#allocation6 + $0x458] sm:$0xff]
    %v262 = vld [vmem:[#allocation6 + $0x460] sm:$0xff]
    %v263 = vld [vmem:[#allocation6 + $0x468] sm:$0xff]
    %v264 = vld [vmem:[#allocation6 + $0x470] sm:$0xff]
    %v265 = vld [vmem:[#allocation6 + $0x478] sm:$0xff]
    %v266 = vld [vmem:[#allocation6 + $0x480] sm:$0xff]
    %v267 = vld [vmem:[#allocation6 + $0x488] sm:$0xff]
    %v268 = vld [vmem:[#allocation6 + $0x490] sm:$0xff]
    %v269 = vld [vmem:[#allocation6 + $0x498] sm:$0xff]
    %v270 = vld [vmem:[#allocation6 + $0x4a0] sm:$0xff]
    %v271 = vld [vmem:[#allocation6 + $0x4a8] sm:$0xff]
    %v272 = vld [vmem:[#allocation6 + $0x4b0] sm:$0xff]
    %v273 = vld [vmem:[#allocation6 + $0x4b8] sm:$0xff]
    %v274 = vld [vmem:[#allocation6 + $0x4c0] sm:$0xff]
    %v275 = vld [vmem:[#allocation6 + $0x4c8] sm:$0xff]
    %v276 = vld [vmem:[#allocation6 + $0x4d0] sm:$0xff]
    %v277 = vld [vmem:[#allocation6 + $0x4d8] sm:$0xff]
    %v278 = vld [vmem:[#allocation6 + $0x4e0] sm:$0xff]
    %v279 = vld [vmem:[#allocation6 + $0x4e8] sm:$0xff]
    %v280 = vld [vmem:[#allocation6 + $0x4f0] sm:$0xff]
    %v281 = vld [vmem:[#allocation6 + $0x4f8] sm:$0xff]
    %v282 = vld [vmem:[#allocation6 + $0x500] sm:$0xff]
    %v283 = vld [vmem:[#allocation6 + $0x508] sm:$0xff]
    %v284 = vld [vmem:[#allocation6 + $0x510] sm:$0xff]
    %v285 = vld [vmem:[#allocation6 + $0x518] sm:$0xff]
    %v286 = vld [vmem:[#allocation6 + $0x520] sm:$0xff]
    %v287 = vld [vmem:[#allocation6 + $0x528] sm:$0xff]
    %v288 = vld [vmem:[#allocation6 + $0x530] sm:$0xff]
    %v289 = vld [vmem:[#allocation6 + $0x538] sm:$0xff]
    %v290 = vld [vmem:[#allocation6 + $0x540] sm:$0xff]
    %v291 = vld [vmem:[#allocation6 + $0x548] sm:$0xff]
    %v292 = vld [vmem:[#allocation6 + $0x550] sm:$0xff]
    %v293 = vld [vmem:[#allocation6 + $0x558] sm:$0xff]
    %v294 = vld [vmem:[#allocation6 + $0x560] sm:$0xff]
    %v295 = vld [vmem:[#allocation6 + $0x568] sm:$0xff]
    %v296 = vld [vmem:[#allocation6 + $0x570] sm:$0xff]
    %v297 = vld [vmem:[#allocation6 + $0x578] sm:$0xff]
    %v298 = vld [vmem:[#allocation6 + $0x580] sm:$0xff]
    %v299 = vld [vmem:[#allocation6 + $0x588] sm:$0xff]
    %v300 = vld [vmem:[#allocation6 + $0x590] sm:$0xff]
    %v301 = vld [vmem:[#allocation6 + $0x598] sm:$0xff]
    %v302 = vld [vmem:[#allocation6 + $0x5a0] sm:$0xff]
    %v303 = vld [vmem:[#allocation6 + $0x5a8] sm:$0xff]
    %v304 = vld [vmem:[#allocation6 + $0x5b0] sm:$0xff]
    %v305 = vld [vmem:[#allocation6 + $0x5b8] sm:$0xff]
    %v306 = vld [vmem:[#allocation6 + $0x5c0] sm:$0xff]
    %v307 = vld [vmem:[#allocation6 + $0x5c8] sm:$0xff]
    %v308 = vld [vmem:[#allocation6 + $0x5d0] sm:$0xff]
    %v309 = vld [vmem:[#allocation6 + $0x5d8] sm:$0xff]
    %v310 = vld [vmem:[#allocation6 + $0x5e0] sm:$0xff]
    %v311 = vld [vmem:[#allocation6 + $0x5e8] sm:$0xff]
    %v312 = vld [vmem:[#allocation6 + $0x5f0] sm:$0xff]
    %v313 = vld [vmem:[#allocation6 + $0x5f8] sm:$0xff]
    %v314 = vld [vmem:[#allocation6 + $0x600] sm:$0xff]
    %v315 = vld [vmem:[#allocation6 + $0x608] sm:$0xff]
    %v316 = vld [vmem:[#allocation6 + $0x610] sm:$0xff]
    %v317 = vld [vmem:[#allocation6 + $0x618] sm:$0xff]
    %v318 = vld [vmem:[#allocation6 + $0x620] sm:$0xff]
    %v319 = vld [vmem:[#allocation6 + $0x628] sm:$0xff]
    %v320 = vld [vmem:[#allocation6 + $0x630] sm:$0xff]
    %v321 = vld [vmem:[#allocation6 + $0x638] sm:$0xff]
    %v322 = vld [vmem:[#allocation6 + $0x640] sm:$0xff]
    %v323 = vld [vmem:[#allocation6 + $0x648] sm:$0xff]
    %v324 = vld [vmem:[#allocation6 + $0x650] sm:$0xff]
    %v325 = vld [vmem:[#allocation6 + $0x658] sm:$0xff]
    %v326 = vld [vmem:[#allocation6 + $0x660] sm:$0xff]
    %v327 = vld [vmem:[#allocation6 + $0x668] sm:$0xff]
    %v328 = vld [vmem:[#allocation6 + $0x670] sm:$0xff]
    %v329 = vld [vmem:[#allocation6 + $0x678] sm:$0xff]
    %v330 = vld [vmem:[#allocation6 + $0x680] sm:$0xff]
    %v331 = vld [vmem:[#allocation6 + $0x688] sm:$0xff]
    %v332 = vld [vmem:[#allocation6 + $0x690] sm:$0xff]
    %v333 = vld [vmem:[#allocation6 + $0x698] sm:$0xff]
    %v334 = vld [vmem:[#allocation6 + $0x6a0] sm:$0xff]
    %v335 = vld [vmem:[#allocation6 + $0x6a8] sm:$0xff]
    %v336 = vld [vmem:[#allocation6 + $0x6b0] sm:$0xff]
    %v337 = vld [vmem:[#allocation6 + $0x6b8] sm:$0xff]
    %v338 = vld [vmem:[#allocation6 + $0x6c0] sm:$0xff]
    %v339 = vld [vmem:[#allocation6 + $0x6c8] sm:$0xff]
    %v340 = vld [vmem:[#allocation6 + $0x6d0] sm:$0xff]
    %v341 = vld [vmem:[#allocation6 + $0x6d8] sm:$0xff]
    %v342 = vld [vmem:[#allocation6 + $0x6e0] sm:$0xff]
    %v343 = vld [vmem:[#allocation6 + $0x6e8] sm:$0xff]
    %v344 = vld [vmem:[#allocation6 + $0x6f0] sm:$0xff]
    %v345 = vld [vmem:[#allocation6 + $0x6f8] sm:$0xff]
    %v346 = vld [vmem:[#allocation6 + $0x700] sm:$0xff]
    %v347 = vld [vmem:[#allocation6 + $0x708] sm:$0xff]
    %v348 = vld [vmem:[#allocation6 + $0x710] sm:$0xff]
    %v349 = vld [vmem:[#allocation6 + $0x718] sm:$0xff]
    %v350 = vld [vmem:[#allocation6 + $0x720] sm:$0xff]
    %v351 = vld [vmem:[#allocation6 + $0x728] sm:$0xff]
    %v352 = vld [vmem:[#allocation6 + $0x730] sm:$0xff]
    %v353 = vld [vmem:[#allocation6 + $0x738] sm:$0xff]
    %v354 = vld [vmem:[#allocation6 + $0x740] sm:$0xff]
    %v355 = vld [vmem:[#allocation6 + $0x748] sm:$0xff]
    %v356 = vld [vmem:[#allocation6 + $0x750] sm:$0xff]
    %v357 = vld [vmem:[#allocation6 + $0x758] sm:$0xff]
    %v358 = vld [vmem:[#allocation6 + $0x760] sm:$0xff]
    %v359 = vld [vmem:[#allocation6 + $0x768] sm:$0xff]
    %v360 = vld [vmem:[#allocation6 + $0x770] sm:$0xff]
    %v361 = vld [vmem:[#allocation6 + $0x778] sm:$0xff]
    %v362 = vld [vmem:[#allocation6 + $0x780] sm:$0xff]
    %v363 = vld [vmem:[#allocation6 + $0x788] sm:$0xff]
    %v364 = vld [vmem:[#allocation6 + $0x790] sm:$0xff]
    %v365 = vld [vmem:[#allocation6 + $0x798] sm:$0xff]
    %v366 = vld [vmem:[#allocation6 + $0x7a0] sm:$0xff]
    %v367 = vld [vmem:[#allocation6 + $0x7a8] sm:$0xff]
    %v368 = vld [vmem:[#allocation6 + $0x7b0] sm:$0xff]
    %v369 = vld [vmem:[#allocation6 + $0x7b8] sm:$0xff]
    %v370 = vld [vmem:[#allocation6 + $0x7c0] sm:$0xff]
    %v371 = vld [vmem:[#allocation6 + $0x7c8] sm:$0xff]
    %v372 = vld [vmem:[#allocation6 + $0x7d0] sm:$0xff]
    %v373 = vld [vmem:[#allocation6 + $0x7d8] sm:$0xff]
    %v374 = vld [vmem:[#allocation6 + $0x7e0] sm:$0xff]
    %v375 = vld [vmem:[#allocation6 + $0x7e8] sm:$0xff]
    %v376 = vld [vmem:[#allocation6 + $0x7f0] sm:$0xff]
    %v377 = vld [vmem:[#allocation6 + $0x7f8] sm:$0xff]
    %v378 = vld [vmem:[#allocation6 + $0x800] sm:$0xff]
    %v379 = vld [vmem:[#allocation6 + $0x808] sm:$0xff]
    %v380 = vld [vmem:[#allocation6 + $0x810] sm:$0xff]
    %v381 = vld [vmem:[#allocation6 + $0x818] sm:$0xff]
    %v382 = vld [vmem:[#allocation6 + $0x820] sm:$0xff]
    %v383 = vld [vmem:[#allocation6 + $0x828] sm:$0xff]
    %v384 = vld [vmem:[#allocation6 + $0x830] sm:$0xff]
    %v385 = vld [vmem:[#allocation6 + $0x838] sm:$0xff]
    %v386 = vld [vmem:[#allocation6 + $0x840] sm:$0xff]
    %v387 = vld [vmem:[#allocation6 + $0x848] sm:$0xff]
    %v388 = vld [vmem:[#allocation6 + $0x850] sm:$0xff]
    %v389 = vld [vmem:[#allocation6 + $0x858] sm:$0xff]
    %v390 = vld [vmem:[#allocation6 + $0x860] sm:$0xff]
    %v391 = vld [vmem:[#allocation6 + $0x868] sm:$0xff]
    %v392 = vld [vmem:[#allocation6 + $0x870] sm:$0xff]
    %v393 = vld [vmem:[#allocation6 + $0x878] sm:$0xff]
    %v394 = vld [vmem:[#allocation6 + $0x880] sm:$0xff]
    %v395 = vld [vmem:[#allocation6 + $0x888] sm:$0xff]
    %v396 = vld [vmem:[#allocation6 + $0x890] sm:$0xff]
    %v397 = vld [vmem:[#allocation6 + $0x898] sm:$0xff]
    %v398 = vld [vmem:[#allocation6 + $0x8a0] sm:$0xff]
    %v399 = vld [vmem:[#allocation6 + $0x8a8] sm:$0xff]
    %v400 = vld [vmem:[#allocation6 + $0x8b0] sm:$0xff]
    %v401 = vld [vmem:[#allocation6 + $0x8b8] sm:$0xff]
    %v402 = vld [vmem:[#allocation6 + $0x8c0] sm:$0xff]
    %v403 = vld [vmem:[#allocation6 + $0x8c8] sm:$0xff]
    %v404 = vld [vmem:[#allocation6 + $0x8d0] sm:$0xff]
    %v405 = vld [vmem:[#allocation6 + $0x8d8] sm:$0xff]
    %v406 = vld [vmem:[#allocation6 + $0x8e0] sm:$0xff]
    %v407 = vld [vmem:[#allocation6 + $0x8e8] sm:$0xff]
    %v408 = vld [vmem:[#allocation6 + $0x8f0] sm:$0xff]
    %v409 = vld [vmem:[#allocation6 + $0x8f8] sm:$0xff]
    %v410 = vld [vmem:[#allocation6 + $0x900] sm:$0xff]
    %v411 = vld [vmem:[#allocation6 + $0x908] sm:$0xff]
    %v412 = vld [vmem:[#allocation6 + $0x910] sm:$0xff]
    %v413 = vld [vmem:[#allocation6 + $0x918] sm:$0xff]
    %v414 = vld [vmem:[#allocation6 + $0x920] sm:$0xff]
    %v415 = vld [vmem:[#allocation6 + $0x928] sm:$0xff]
    %v416 = vld [vmem:[#allocation6 + $0x930] sm:$0xff]
    %v417 = vld [vmem:[#allocation6 + $0x938] sm:$0xff]
    %v418 = vld [vmem:[#allocation6 + $0x940] sm:$0xff]
    %v419 = vld [vmem:[#allocation6 + $0x948] sm:$0xff]
    %v420 = vld [vmem:[#allocation6 + $0x950] sm:$0xff]
    %v421 = vld [vmem:[#allocation6 + $0x958] sm:$0xff]
    %v422 = vld [vmem:[#allocation6 + $0x960] sm:$0xff]
    %v423 = vld [vmem:[#allocation6 + $0x968] sm:$0xff]
    %v424 = vld [vmem:[#allocation6 + $0x970] sm:$0xff]
    %v425 = vld [vmem:[#allocation6 + $0x978] sm:$0xff]
    %v426 = vld [vmem:[#allocation6 + $0x980] sm:$0xff]
    %v427 = vld [vmem:[#allocation6 + $0x988] sm:$0xff]
    %v428 = vld [vmem:[#allocation6 + $0x990] sm:$0xff]
    %v429 = vld [vmem:[#allocation6 + $0x998] sm:$0xff]
    %v430 = vld [vmem:[#allocation6 + $0x9a0] sm:$0xff]
    %v431 = vld [vmem:[#allocation6 + $0x9a8] sm:$0xff]
    %v432 = vld [vmem:[#allocation6 + $0x9b0] sm:$0xff]
    %v433 = vld [vmem:[#allocation6 + $0x9b8] sm:$0xff]
    %v434 = vld [vmem:[#allocation6 + $0x9c0] sm:$0xff]
    %v435 = vld [vmem:[#allocation6 + $0x9c8] sm:$0xff]
    %v436 = vld [vmem:[#allocation6 + $0x9d0] sm:$0xff]
    %v437 = vld [vmem:[#allocation6 + $0x9d8] sm:$0xff]
    %v438 = vld [vmem:[#allocation6 + $0x9e0] sm:$0xff]
    %v439 = vld [vmem:[#allocation6 + $0x9e8] sm:$0xff]
    %v440 = vld [vmem:[#allocation6 + $0x9f0] sm:$0xff]
    %v441 = vld [vmem:[#allocation6 + $0x9f8] sm:$0xff]
    %v442 = vld [vmem:[#allocation6 + $0xa00] sm:$0xff]
    %v443 = vld [vmem:[#allocation6 + $0xa08] sm:$0xff]
    %v444 = vld [vmem:[#allocation6 + $0xa10] sm:$0xff]
    %v445 = vld [vmem:[#allocation6 + $0xa18] sm:$0xff]
    %v446 = vld [vmem:[#allocation6 + $0xa20] sm:$0xff]
    %v447 = vld [vmem:[#allocation6 + $0xa28] sm:$0xff]
    %v448 = vld [vmem:[#allocation6 + $0xa30] sm:$0xff]
    %v449 = vld [vmem:[#allocation6 + $0xa38] sm:$0xff]
    %v450 = vld [vmem:[#allocation6 + $0xa40] sm:$0xff]
    %v451 = vld [vmem:[#allocation6 + $0xa48] sm:$0xff]
    %v452 = vld [vmem:[#allocation6 + $0xa50] sm:$0xff]
    %v453 = vld [vmem:[#allocation6 + $0xa58] sm:$0xff]
    %v454 = vld [vmem:[#allocation6 + $0xa60] sm:$0xff]
    %v455 = vld [vmem:[#allocation6 + $0xa68] sm:$0xff]
    %v456 = vld [vmem:[#allocation6 + $0xa70] sm:$0xff]
    %v457 = vld [vmem:[#allocation6 + $0xa78] sm:$0xff]
    %v458 = vld [vmem:[#allocation6 + $0xa80] sm:$0xff]
    %v459 = vld [vmem:[#allocation6 + $0xa88] sm:$0xff]
    %v460 = vld [vmem:[#allocation6 + $0xa90] sm:$0xff]
    %v461 = vld [vmem:[#allocation6 + $0xa98] sm:$0xff]
    %v462 = vld [vmem:[#allocation6 + $0xaa0] sm:$0xff]
    %v463 = vld [vmem:[#allocation6 + $0xaa8] sm:$0xff]
    %v464 = vld [vmem:[#allocation6 + $0xab0] sm:$0xff]
    %v465 = vld [vmem:[#allocation6 + $0xab8] sm:$0xff]
    %v466 = vld [vmem:[#allocation6 + $0xac0] sm:$0xff]
    %v467 = vld [vmem:[#allocation6 + $0xac8] sm:$0xff]
    %v468 = vld [vmem:[#allocation6 + $0xad0] sm:$0xff]
    %v469 = vld [vmem:[#allocation6 + $0xad8] sm:$0xff]
    %v470 = vld [vmem:[#allocation6 + $0xae0] sm:$0xff]
    %v471 = vld [vmem:[#allocation6 + $0xae8] sm:$0xff]
    %v472 = vld [vmem:[#allocation6 + $0xaf0] sm:$0xff]
    %v473 = vld [vmem:[#allocation6 + $0xaf8] sm:$0xff]
    %v474 = vld [vmem:[#allocation6 + $0xb00] sm:$0xff]
    %v475 = vld [vmem:[#allocation6 + $0xb08] sm:$0xff]
    %v476 = vld [vmem:[#allocation6 + $0xb10] sm:$0xff]
    %v477 = vld [vmem:[#allocation6 + $0xb18] sm:$0xff]
    %v478 = vld [vmem:[#allocation6 + $0xb20] sm:$0xff]
    %v479 = vld [vmem:[#allocation6 + $0xb28] sm:$0xff]
    %v480 = vld [vmem:[#allocation6 + $0xb30] sm:$0xff]
    %v481 = vld [vmem:[#allocation6 + $0xb38] sm:$0xff]
    %v482 = vld [vmem:[#allocation6 + $0xb40] sm:$0xff]
    %v483 = vld [vmem:[#allocation6 + $0xb48] sm:$0xff]
    %v484 = vld [vmem:[#allocation6 + $0xb50] sm:$0xff]
    %v485 = vld [vmem:[#allocation6 + $0xb58] sm:$0xff]
    %v486 = vld [vmem:[#allocation6 + $0xb60] sm:$0xff]
    %v487 = vld [vmem:[#allocation6 + $0xb68] sm:$0xff]
    %v488 = vld [vmem:[#allocation6 + $0xb70] sm:$0xff]
    %v489 = vld [vmem:[#allocation6 + $0xb78] sm:$0xff]
    %v490 = vld [vmem:[#allocation6 + $0xb80] sm:$0xff]
    %v491 = vld [vmem:[#allocation6 + $0xb88] sm:$0xff]
    %v492 = vld [vmem:[#allocation6 + $0xb90] sm:$0xff]
    %v493 = vld [vmem:[#allocation6 + $0xb98] sm:$0xff]
    %v494 = vld [vmem:[#allocation6 + $0xba0] sm:$0xff]
    %v495 = vld [vmem:[#allocation6 + $0xba8] sm:$0xff]
    %v496 = vld [vmem:[#allocation6 + $0xbb0] sm:$0xff]
    %v497 = vld [vmem:[#allocation6 + $0xbb8] sm:$0xff]
    %v498 = vld [vmem:[#allocation6 + $0xbc0] sm:$0xff]
    %v499 = vld [vmem:[#allocation6 + $0xbc8] sm:$0xff]
    %v500 = vld [vmem:[#allocation6 + $0xbd0] sm:$0xff]
    %v501 = vld [vmem:[#allocation6 + $0xbd8] sm:$0xff]
    %v502 = vld [vmem:[#allocation6 + $0xbe0] sm:$0xff]
    %v503 = vld [vmem:[#allocation6 + $0xbe8] sm:$0xff]
    %v504 = vld [vmem:[#allocation6 + $0xbf0] sm:$0xff]
    %v505 = vld [vmem:[#allocation6 + $0xbf8] sm:$0xff]
    %v890 = vunpack.c.l.b16 %v122
    %v891 = vunpack.c.h.b16 %v122
    %v892 = vunpack.c.l.b16 %v123
    %v893 = vunpack.c.h.b16 %v123
    %v894 = vunpack.c.l.b16 %v124
    %v895 = vunpack.c.h.b16 %v124
    %v896 = vunpack.c.l.b16 %v125
    %v897 = vunpack.c.h.b16 %v125
    %v898 = vunpack.c.l.b16 %v126
    %v899 = vunpack.c.h.b16 %v126
    %v900 = vunpack.c.l.b16 %v127
    %v901 = vunpack.c.h.b16 %v127
    %v902 = vunpack.c.l.b16 %v128
    %v903 = vunpack.c.h.b16 %v128
    %v904 = vunpack.c.l.b16 %v129
    %v905 = vunpack.c.h.b16 %v129
    %v906 = vunpack.c.l.b16 %v130
    %v907 = vunpack.c.h.b16 %v130
    %v908 = vunpack.c.l.b16 %v131
    %v909 = vunpack.c.h.b16 %v131
    %v910 = vunpack.c.l.b16 %v132
    %v911 = vunpack.c.h.b16 %v132
    %v912 = vunpack.c.l.b16 %v133
    %v913 = vunpack.c.h.b16 %v133
    %v914 = vunpack.c.l.b16 %v134
    %v915 = vunpack.c.h.b16 %v134
    %v916 = vunpack.c.l.b16 %v135
    %v917 = vunpack.c.h.b16 %v135
    %v918 = vunpack.c.l.b16 %v136
    %v919 = vunpack.c.h.b16 %v136
    %v920 = vunpack.c.l.b16 %v137
    %v921 = vunpack.c.h.b16 %v137
    %v922 = vunpack.c.l.b16 %v138
    %v923 = vunpack.c.h.b16 %v138
    %v924 = vunpack.c.l.b16 %v139
    %v925 = vunpack.c.h.b16 %v139
    %v926 = vunpack.c.l.b16 %v140
    %v927 = vunpack.c.h.b16 %v140
    %v928 = vunpack.c.l.b16 %v141
    %v929 = vunpack.c.h.b16 %v141
    %v930 = vunpack.c.l.b16 %v142
    %v931 = vunpack.c.h.b16 %v142
    %v932 = vunpack.c.l.b16 %v143
    %v933 = vunpack.c.h.b16 %v143
    %v934 = vunpack.c.l.b16 %v144
    %v935 = vunpack.c.h.b16 %v144
    %v936 = vunpack.c.l.b16 %v145
    %v937 = vunpack.c.h.b16 %v145
    %v938 = vunpack.c.l.b16 %v146
    %v939 = vunpack.c.h.b16 %v146
    %v940 = vunpack.c.l.b16 %v147
    %v941 = vunpack.c.h.b16 %v147
    %v942 = vunpack.c.l.b16 %v148
    %v943 = vunpack.c.h.b16 %v148
    %v944 = vunpack.c.l.b16 %v149
    %v945 = vunpack.c.h.b16 %v149
    %v946 = vunpack.c.l.b16 %v150
    %v947 = vunpack.c.h.b16 %v150
    %v948 = vunpack.c.l.b16 %v151
    %v949 = vunpack.c.h.b16 %v151
    %v950 = vunpack.c.l.b16 %v152
    %v951 = vunpack.c.h.b16 %v152
    %v952 = vunpack.c.l.b16 %v153
    %v953 = vunpack.c.h.b16 %v153
    %v954 = vunpack.c.l.b16 %v154
    %v955 = vunpack.c.h.b16 %v154
    %v956 = vunpack.c.l.b16 %v155
    %v957 = vunpack.c.h.b16 %v155
    %v958 = vunpack.c.l.b16 %v156
    %v959 = vunpack.c.h.b16 %v156
    %v960 = vunpack.c.l.b16 %v157
    %v961 = vunpack.c.h.b16 %v157
    %v962 = vunpack.c.l.b16 %v158
    %v963 = vunpack.c.h.b16 %v158
    %v964 = vunpack.c.l.b16 %v159
    %v965 = vunpack.c.h.b16 %v159
    %v966 = vunpack.c.l.b16 %v160
    %v967 = vunpack.c.h.b16 %v160
    %v968 = vunpack.c.l.b16 %v161
    %v969 = vunpack.c.h.b16 %v161
    %v970 = vunpack.c.l.b16 %v162
    %v971 = vunpack.c.h.b16 %v162
    %v972 = vunpack.c.l.b16 %v163
    %v973 = vunpack.c.h.b16 %v163
    %v974 = vunpack.c.l.b16 %v164
    %v975 = vunpack.c.h.b16 %v164
    %v976 = vunpack.c.l.b16 %v165
    %v977 = vunpack.c.h.b16 %v165
    %v978 = vunpack.c.l.b16 %v166
    %v979 = vunpack.c.h.b16 %v166
    %v980 = vunpack.c.l.b16 %v167
    %v981 = vunpack.c.h.b16 %v167
    %v982 = vunpack.c.l.b16 %v168
    %v983 = vunpack.c.h.b16 %v168
    %v984 = vunpack.c.l.b16 %v169
    %v985 = vunpack.c.h.b16 %v169
    %v986 = vunpack.c.l.b16 %v170
    %v987 = vunpack.c.h.b16 %v170
    %v988 = vunpack.c.l.b16 %v171
    %v989 = vunpack.c.h.b16 %v171
    %v990 = vunpack.c.l.b16 %v172
    %v991 = vunpack.c.h.b16 %v172
    %v992 = vunpack.c.l.b16 %v173
    %v993 = vunpack.c.h.b16 %v173
    %v994 = vunpack.c.l.b16 %v174
    %v995 = vunpack.c.h.b16 %v174
    %v996 = vunpack.c.l.b16 %v175
    %v997 = vunpack.c.h.b16 %v175
    %v998 = vunpack.c.l.b16 %v176
    %v999 = vunpack.c.h.b16 %v176
    %v1000 = vunpack.c.l.b16 %v177
    %v1001 = vunpack.c.h.b16 %v177
    %v1002 = vunpack.c.l.b16 %v178
    %v1003 = vunpack.c.h.b16 %v178
    %v1004 = vunpack.c.l.b16 %v179
    %v1005 = vunpack.c.h.b16 %v179
    %v1006 = vunpack.c.l.b16 %v180
    %v1007 = vunpack.c.h.b16 %v180
    %v1008 = vunpack.c.l.b16 %v181
    %v1009 = vunpack.c.h.b16 %v181
    %v1010 = vunpack.c.l.b16 %v182
    %v1011 = vunpack.c.h.b16 %v182
    %v1012 = vunpack.c.l.b16 %v183
    %v1013 = vunpack.c.h.b16 %v183
    %v1014 = vunpack.c.l.b16 %v184
    %v1015 = vunpack.c.h.b16 %v184
    %v1016 = vunpack.c.l.b16 %v185
    %v1017 = vunpack.c.h.b16 %v185
    %v1018 = vunpack.c.l.b16 %v186
    %v1019 = vunpack.c.h.b16 %v186
    %v1020 = vunpack.c.l.b16 %v187
    %v1021 = vunpack.c.h.b16 %v187
    %v1022 = vunpack.c.l.b16 %v188
    %v1023 = vunpack.c.h.b16 %v188
    %v1024 = vunpack.c.l.b16 %v189
    %v1025 = vunpack.c.h.b16 %v189
    %v1026 = vunpack.c.l.b16 %v190
    %v1027 = vunpack.c.h.b16 %v190
    %v1028 = vunpack.c.l.b16 %v191
    %v1029 = vunpack.c.h.b16 %v191
    %v1030 = vunpack.c.l.b16 %v192
    %v1031 = vunpack.c.h.b16 %v192
    %v1032 = vunpack.c.l.b16 %v193
    %v1033 = vunpack.c.h.b16 %v193
    %v1034 = vunpack.c.l.b16 %v194
    %v1035 = vunpack.c.h.b16 %v194
    %v1036 = vunpack.c.l.b16 %v195
    %v1037 = vunpack.c.h.b16 %v195
    %v1038 = vunpack.c.l.b16 %v196
    %v1039 = vunpack.c.h.b16 %v196
    %v1040 = vunpack.c.l.b16 %v197
    %v1041 = vunpack.c.h.b16 %v197
    %v1042 = vunpack.c.l.b16 %v198
    %v1043 = vunpack.c.h.b16 %v198
    %v1044 = vunpack.c.l.b16 %v199
    %v1045 = vunpack.c.h.b16 %v199
    %v1046 = vunpack.c.l.b16 %v200
    %v1047 = vunpack.c.h.b16 %v200
    %v1048 = vunpack.c.l.b16 %v201
    %v1049 = vunpack.c.h.b16 %v201
    %v1050 = vunpack.c.l.b16 %v202
    %v1051 = vunpack.c.h.b16 %v202
    %v1052 = vunpack.c.l.b16 %v203
    %v1053 = vunpack.c.h.b16 %v203
    %v1054 = vunpack.c.l.b16 %v204
    %v1055 = vunpack.c.h.b16 %v204
    %v1056 = vunpack.c.l.b16 %v205
    %v1057 = vunpack.c.h.b16 %v205
    %v1058 = vunpack.c.l.b16 %v206
    %v1059 = vunpack.c.h.b16 %v206
    %v1060 = vunpack.c.l.b16 %v207
    %v1061 = vunpack.c.h.b16 %v207
    %v1062 = vunpack.c.l.b16 %v208
    %v1063 = vunpack.c.h.b16 %v208
    %v1064 = vunpack.c.l.b16 %v209
    %v1065 = vunpack.c.h.b16 %v209
    %v1066 = vunpack.c.l.b16 %v210
    %v1067 = vunpack.c.h.b16 %v210
    %v1068 = vunpack.c.l.b16 %v211
    %v1069 = vunpack.c.h.b16 %v211
    %v1070 = vunpack.c.l.b16 %v212
    %v1071 = vunpack.c.h.b16 %v212
    %v1072 = vunpack.c.l.b16 %v213
    %v1073 = vunpack.c.h.b16 %v213
    %v1074 = vunpack.c.l.b16 %v214
    %v1075 = vunpack.c.h.b16 %v214
    %v1076 = vunpack.c.l.b16 %v215
    %v1077 = vunpack.c.h.b16 %v215
    %v1078 = vunpack.c.l.b16 %v216
    %v1079 = vunpack.c.h.b16 %v216
    %v1080 = vunpack.c.l.b16 %v217
    %v1081 = vunpack.c.h.b16 %v217
    %v1082 = vunpack.c.l.b16 %v218
    %v1083 = vunpack.c.h.b16 %v218
    %v1084 = vunpack.c.l.b16 %v219
    %v1085 = vunpack.c.h.b16 %v219
    %v1086 = vunpack.c.l.b16 %v220
    %v1087 = vunpack.c.h.b16 %v220
    %v1088 = vunpack.c.l.b16 %v221
    %v1089 = vunpack.c.h.b16 %v221
    %v1090 = vunpack.c.l.b16 %v222
    %v1091 = vunpack.c.h.b16 %v222
    %v1092 = vunpack.c.l.b16 %v223
    %v1093 = vunpack.c.h.b16 %v223
    %v1094 = vunpack.c.l.b16 %v224
    %v1095 = vunpack.c.h.b16 %v224
    %v1096 = vunpack.c.l.b16 %v225
    %v1097 = vunpack.c.h.b16 %v225
    %v1098 = vunpack.c.l.b16 %v226
    %v1099 = vunpack.c.h.b16 %v226
    %v1100 = vunpack.c.l.b16 %v227
    %v1101 = vunpack.c.h.b16 %v227
    %v1102 = vunpack.c.l.b16 %v228
    %v1103 = vunpack.c.h.b16 %v228
    %v1104 = vunpack.c.l.b16 %v229
    %v1105 = vunpack.c.h.b16 %v229
    %v1106 = vunpack.c.l.b16 %v230
    %v1107 = vunpack.c.h.b16 %v230
    %v1108 = vunpack.c.l.b16 %v231
    %v1109 = vunpack.c.h.b16 %v231
    %v1110 = vunpack.c.l.b16 %v232
    %v1111 = vunpack.c.h.b16 %v232
    %v1112 = vunpack.c.l.b16 %v233
    %v1113 = vunpack.c.h.b16 %v233
    %v1114 = vunpack.c.l.b16 %v234
    %v1115 = vunpack.c.h.b16 %v234
    %v1116 = vunpack.c.l.b16 %v235
    %v1117 = vunpack.c.h.b16 %v235
    %v1118 = vunpack.c.l.b16 %v236
    %v1119 = vunpack.c.h.b16 %v236
    %v1120 = vunpack.c.l.b16 %v237
    %v1121 = vunpack.c.h.b16 %v237
    %v1122 = vunpack.c.l.b16 %v238
    %v1123 = vunpack.c.h.b16 %v238
    %v1124 = vunpack.c.l.b16 %v239
    %v1125 = vunpack.c.h.b16 %v239
    %v1126 = vunpack.c.l.b16 %v240
    %v1127 = vunpack.c.h.b16 %v240
    %v1128 = vunpack.c.l.b16 %v241
    %v1129 = vunpack.c.h.b16 %v241
    %v1130 = vunpack.c.l.b16 %v242
    %v1131 = vunpack.c.h.b16 %v242
    %v1132 = vunpack.c.l.b16 %v243
    %v1133 = vunpack.c.h.b16 %v243
    %v1134 = vunpack.c.l.b16 %v244
    %v1135 = vunpack.c.h.b16 %v244
    %v1136 = vunpack.c.l.b16 %v245
    %v1137 = vunpack.c.h.b16 %v245
    %v1138 = vunpack.c.l.b16 %v246
    %v1139 = vunpack.c.h.b16 %v246
    %v1140 = vunpack.c.l.b16 %v247
    %v1141 = vunpack.c.h.b16 %v247
    %v1142 = vunpack.c.l.b16 %v248
    %v1143 = vunpack.c.h.b16 %v248
    %v1144 = vunpack.c.l.b16 %v249
    %v1145 = vunpack.c.h.b16 %v249
    %v1146 = vunpack.c.l.b16 %v250
    %v1147 = vunpack.c.h.b16 %v250
    %v1148 = vunpack.c.l.b16 %v251
    %v1149 = vunpack.c.h.b16 %v251
    %v1150 = vunpack.c.l.b16 %v252
    %v1151 = vunpack.c.h.b16 %v252
    %v1152 = vunpack.c.l.b16 %v253
    %v1153 = vunpack.c.h.b16 %v253
    %v1154 = vunpack.c.l.b16 %v254
    %v1155 = vunpack.c.h.b16 %v254
    %v1156 = vunpack.c.l.b16 %v255
    %v1157 = vunpack.c.h.b16 %v255
    %v1158 = vunpack.c.l.b16 %v256
    %v1159 = vunpack.c.h.b16 %v256
    %v1160 = vunpack.c.l.b16 %v257
    %v1161 = vunpack.c.h.b16 %v257
    %v1162 = vunpack.c.l.b16 %v258
    %v1163 = vunpack.c.h.b16 %v258
    %v1164 = vunpack.c.l.b16 %v259
    %v1165 = vunpack.c.h.b16 %v259
    %v1166 = vunpack.c.l.b16 %v260
    %v1167 = vunpack.c.h.b16 %v260
    %v1168 = vunpack.c.l.b16 %v261
    %v1169 = vunpack.c.h.b16 %v261
    %v1170 = vunpack.c.l.b16 %v262
    %v1171 = vunpack.c.h.b16 %v262
    %v1172 = vunpack.c.l.b16 %v263
    %v1173 = vunpack.c.h.b16 %v263
    %v1174 = vunpack.c.l.b16 %v264
    %v1175 = vunpack.c.h.b16 %v264
    %v1176 = vunpack.c.l.b16 %v265
    %v1177 = vunpack.c.h.b16 %v265
    %v1178 = vunpack.c.l.b16 %v266
    %v1179 = vunpack.c.h.b16 %v266
    %v1180 = vunpack.c.l.b16 %v267
    %v1181 = vunpack.c.h.b16 %v267
    %v1182 = vunpack.c.l.b16 %v268
    %v1183 = vunpack.c.h.b16 %v268
    %v1184 = vunpack.c.l.b16 %v269
    %v1185 = vunpack.c.h.b16 %v269
    %v1186 = vunpack.c.l.b16 %v270
    %v1187 = vunpack.c.h.b16 %v270
    %v1188 = vunpack.c.l.b16 %v271
    %v1189 = vunpack.c.h.b16 %v271
    %v1190 = vunpack.c.l.b16 %v272
    %v1191 = vunpack.c.h.b16 %v272
    %v1192 = vunpack.c.l.b16 %v273
    %v1193 = vunpack.c.h.b16 %v273
    %v1194 = vunpack.c.l.b16 %v274
    %v1195 = vunpack.c.h.b16 %v274
    %v1196 = vunpack.c.l.b16 %v275
    %v1197 = vunpack.c.h.b16 %v275
    %v1198 = vunpack.c.l.b16 %v276
    %v1199 = vunpack.c.h.b16 %v276
    %v1200 = vunpack.c.l.b16 %v277
    %v1201 = vunpack.c.h.b16 %v277
    %v1202 = vunpack.c.l.b16 %v278
    %v1203 = vunpack.c.h.b16 %v278
    %v1204 = vunpack.c.l.b16 %v279
    %v1205 = vunpack.c.h.b16 %v279
    %v1206 = vunpack.c.l.b16 %v280
    %v1207 = vunpack.c.h.b16 %v280
    %v1208 = vunpack.c.l.b16 %v281
    %v1209 = vunpack.c.h.b16 %v281
    %v1210 = vunpack.c.l.b16 %v282
    %v1211 = vunpack.c.h.b16 %v282
    %v1212 = vunpack.c.l.b16 %v283
    %v1213 = vunpack.c.h.b16 %v283
    %v1214 = vunpack.c.l.b16 %v284
    %v1215 = vunpack.c.h.b16 %v284
    %v1216 = vunpack.c.l.b16 %v285
    %v1217 = vunpack.c.h.b16 %v285
    %v1218 = vunpack.c.l.b16 %v286
    %v1219 = vunpack.c.h.b16 %v286
    %v1220 = vunpack.c.l.b16 %v287
    %v1221 = vunpack.c.h.b16 %v287
    %v1222 = vunpack.c.l.b16 %v288
    %v1223 = vunpack.c.h.b16 %v288
    %v1224 = vunpack.c.l.b16 %v289
    %v1225 = vunpack.c.h.b16 %v289
    %v1226 = vunpack.c.l.b16 %v290
    %v1227 = vunpack.c.h.b16 %v290
    %v1228 = vunpack.c.l.b16 %v291
    %v1229 = vunpack.c.h.b16 %v291
    %v1230 = vunpack.c.l.b16 %v292
    %v1231 = vunpack.c.h.b16 %v292
    %v1232 = vunpack.c.l.b16 %v293
    %v1233 = vunpack.c.h.b16 %v293
    %v1234 = vunpack.c.l.b16 %v294
    %v1235 = vunpack.c.h.b16 %v294
    %v1236 = vunpack.c.l.b16 %v295
    %v1237 = vunpack.c.h.b16 %v295
    %v1238 = vunpack.c.l.b16 %v296
    %v1239 = vunpack.c.h.b16 %v296
    %v1240 = vunpack.c.l.b16 %v297
    %v1241 = vunpack.c.h.b16 %v297
    %v1242 = vunpack.c.l.b16 %v298
    %v1243 = vunpack.c.h.b16 %v298
    %v1244 = vunpack.c.l.b16 %v299
    %v1245 = vunpack.c.h.b16 %v299
    %v1246 = vunpack.c.l.b16 %v300
    %v1247 = vunpack.c.h.b16 %v300
    %v1248 = vunpack.c.l.b16 %v301
    %v1249 = vunpack.c.h.b16 %v301
    %v1250 = vunpack.c.l.b16 %v302
    %v1251 = vunpack.c.h.b16 %v302
    %v1252 = vunpack.c.l.b16 %v303
    %v1253 = vunpack.c.h.b16 %v303
    %v1254 = vunpack.c.l.b16 %v304
    %v1255 = vunpack.c.h.b16 %v304
    %v1256 = vunpack.c.l.b16 %v305
    %v1257 = vunpack.c.h.b16 %v305
    %v1258 = vunpack.c.l.b16 %v306
    %v1259 = vunpack.c.h.b16 %v306
    %v1260 = vunpack.c.l.b16 %v307
    %v1261 = vunpack.c.h.b16 %v307
    %v1262 = vunpack.c.l.b16 %v308
    %v1263 = vunpack.c.h.b16 %v308
    %v1264 = vunpack.c.l.b16 %v309
    %v1265 = vunpack.c.h.b16 %v309
    %v1266 = vunpack.c.l.b16 %v310
    %v1267 = vunpack.c.h.b16 %v310
    %v1268 = vunpack.c.l.b16 %v311
    %v1269 = vunpack.c.h.b16 %v311
    %v1270 = vunpack.c.l.b16 %v312
    %v1271 = vunpack.c.h.b16 %v312
    %v1272 = vunpack.c.l.b16 %v313
    %v1273 = vunpack.c.h.b16 %v313
    %v1274 = vunpack.c.l.b16 %v314
    %v1275 = vunpack.c.h.b16 %v314
    %v1276 = vunpack.c.l.b16 %v315
    %v1277 = vunpack.c.h.b16 %v315
    %v1278 = vunpack.c.l.b16 %v316
    %v1279 = vunpack.c.h.b16 %v316
    %v1280 = vunpack.c.l.b16 %v317
    %v1281 = vunpack.c.h.b16 %v317
    %v1282 = vunpack.c.l.b16 %v318
    %v1283 = vunpack.c.h.b16 %v318
    %v1284 = vunpack.c.l.b16 %v319
    %v1285 = vunpack.c.h.b16 %v319
    %v1286 = vunpack.c.l.b16 %v320
    %v1287 = vunpack.c.h.b16 %v320
    %v1288 = vunpack.c.l.b16 %v321
    %v1289 = vunpack.c.h.b16 %v321
    %v1290 = vunpack.c.l.b16 %v322
    %v1291 = vunpack.c.h.b16 %v322
    %v1292 = vunpack.c.l.b16 %v323
    %v1293 = vunpack.c.h.b16 %v323
    %v1294 = vunpack.c.l.b16 %v324
    %v1295 = vunpack.c.h.b16 %v324
    %v1296 = vunpack.c.l.b16 %v325
    %v1297 = vunpack.c.h.b16 %v325
    %v1298 = vunpack.c.l.b16 %v326
    %v1299 = vunpack.c.h.b16 %v326
    %v1300 = vunpack.c.l.b16 %v327
    %v1301 = vunpack.c.h.b16 %v327
    %v1302 = vunpack.c.l.b16 %v328
    %v1303 = vunpack.c.h.b16 %v328
    %v1304 = vunpack.c.l.b16 %v329
    %v1305 = vunpack.c.h.b16 %v329
    %v1306 = vunpack.c.l.b16 %v330
    %v1307 = vunpack.c.h.b16 %v330
    %v1308 = vunpack.c.l.b16 %v331
    %v1309 = vunpack.c.h.b16 %v331
    %v1310 = vunpack.c.l.b16 %v332
    %v1311 = vunpack.c.h.b16 %v332
    %v1312 = vunpack.c.l.b16 %v333
    %v1313 = vunpack.c.h.b16 %v333
    %v1314 = vunpack.c.l.b16 %v334
    %v1315 = vunpack.c.h.b16 %v334
    %v1316 = vunpack.c.l.b16 %v335
    %v1317 = vunpack.c.h.b16 %v335
    %v1318 = vunpack.c.l.b16 %v336
    %v1319 = vunpack.c.h.b16 %v336
    %v1320 = vunpack.c.l.b16 %v337
    %v1321 = vunpack.c.h.b16 %v337
    %v1322 = vunpack.c.l.b16 %v338
    %v1323 = vunpack.c.h.b16 %v338
    %v1324 = vunpack.c.l.b16 %v339
    %v1325 = vunpack.c.h.b16 %v339
    %v1326 = vunpack.c.l.b16 %v340
    %v1327 = vunpack.c.h.b16 %v340
    %v1328 = vunpack.c.l.b16 %v341
    %v1329 = vunpack.c.h.b16 %v341
    %v1330 = vunpack.c.l.b16 %v342
    %v1331 = vunpack.c.h.b16 %v342
    %v1332 = vunpack.c.l.b16 %v343
    %v1333 = vunpack.c.h.b16 %v343
    %v1334 = vunpack.c.l.b16 %v344
    %v1335 = vunpack.c.h.b16 %v344
    %v1336 = vunpack.c.l.b16 %v345
    %v1337 = vunpack.c.h.b16 %v345
    %v1338 = vunpack.c.l.b16 %v346
    %v1339 = vunpack.c.h.b16 %v346
    %v1340 = vunpack.c.l.b16 %v347
    %v1341 = vunpack.c.h.b16 %v347
    %v1342 = vunpack.c.l.b16 %v348
    %v1343 = vunpack.c.h.b16 %v348
    %v1344 = vunpack.c.l.b16 %v349
    %v1345 = vunpack.c.h.b16 %v349
    %v1346 = vunpack.c.l.b16 %v350
    %v1347 = vunpack.c.h.b16 %v350
    %v1348 = vunpack.c.l.b16 %v351
    %v1349 = vunpack.c.h.b16 %v351
    %v1350 = vunpack.c.l.b16 %v352
    %v1351 = vunpack.c.h.b16 %v352
    %v1352 = vunpack.c.l.b16 %v353
    %v1353 = vunpack.c.h.b16 %v353
    %v1354 = vunpack.c.l.b16 %v354
    %v1355 = vunpack.c.h.b16 %v354
    %v1356 = vunpack.c.l.b16 %v355
    %v1357 = vunpack.c.h.b16 %v355
    %v1358 = vunpack.c.l.b16 %v356
    %v1359 = vunpack.c.h.b16 %v356
    %v1360 = vunpack.c.l.b16 %v357
    %v1361 = vunpack.c.h.b16 %v357
    %v1362 = vunpack.c.l.b16 %v358
    %v1363 = vunpack.c.h.b16 %v358
    %v1364 = vunpack.c.l.b16 %v359
    %v1365 = vunpack.c.h.b16 %v359
    %v1366 = vunpack.c.l.b16 %v360
    %v1367 = vunpack.c.h.b16 %v360
    %v1368 = vunpack.c.l.b16 %v361
    %v1369 = vunpack.c.h.b16 %v361
    %v1370 = vunpack.c.l.b16 %v362
    %v1371 = vunpack.c.h.b16 %v362
    %v1372 = vunpack.c.l.b16 %v363
    %v1373 = vunpack.c.h.b16 %v363
    %v1374 = vunpack.c.l.b16 %v364
    %v1375 = vunpack.c.h.b16 %v364
    %v1376 = vunpack.c.l.b16 %v365
    %v1377 = vunpack.c.h.b16 %v365
    %v1378 = vunpack.c.l.b16 %v366
    %v1379 = vunpack.c.h.b16 %v366
    %v1380 = vunpack.c.l.b16 %v367
    %v1381 = vunpack.c.h.b16 %v367
    %v1382 = vunpack.c.l.b16 %v368
    %v1383 = vunpack.c.h.b16 %v368
    %v1384 = vunpack.c.l.b16 %v369
    %v1385 = vunpack.c.h.b16 %v369
    %v1386 = vunpack.c.l.b16 %v370
    %v1387 = vunpack.c.h.b16 %v370
    %v1388 = vunpack.c.l.b16 %v371
    %v1389 = vunpack.c.h.b16 %v371
    %v1390 = vunpack.c.l.b16 %v372
    %v1391 = vunpack.c.h.b16 %v372
    %v1392 = vunpack.c.l.b16 %v373
    %v1393 = vunpack.c.h.b16 %v373
    %v1394 = vunpack.c.l.b16 %v374
    %v1395 = vunpack.c.h.b16 %v374
    %v1396 = vunpack.c.l.b16 %v375
    %v1397 = vunpack.c.h.b16 %v375
    %v1398 = vunpack.c.l.b16 %v376
    %v1399 = vunpack.c.h.b16 %v376
    %v1400 = vunpack.c.l.b16 %v377
    %v1401 = vunpack.c.h.b16 %v377
    %v1402 = vunpack.c.l.b16 %v378
    %v1403 = vunpack.c.h.b16 %v378
    %v1404 = vunpack.c.l.b16 %v379
    %v1405 = vunpack.c.h.b16 %v379
    %v1406 = vunpack.c.l.b16 %v380
    %v1407 = vunpack.c.h.b16 %v380
    %v1408 = vunpack.c.l.b16 %v381
    %v1409 = vunpack.c.h.b16 %v381
    %v1410 = vunpack.c.l.b16 %v382
    %v1411 = vunpack.c.h.b16 %v382
    %v1412 = vunpack.c.l.b16 %v383
    %v1413 = vunpack.c.h.b16 %v383
    %v1414 = vunpack.c.l.b16 %v384
    %v1415 = vunpack.c.h.b16 %v384
    %v1416 = vunpack.c.l.b16 %v385
    %v1417 = vunpack.c.h.b16 %v385
    %v1418 = vunpack.c.l.b16 %v386
    %v1419 = vunpack.c.h.b16 %v386
    %v1420 = vunpack.c.l.b16 %v387
    %v1421 = vunpack.c.h.b16 %v387
    %v1422 = vunpack.c.l.b16 %v388
    %v1423 = vunpack.c.h.b16 %v388
    %v1424 = vunpack.c.l.b16 %v389
    %v1425 = vunpack.c.h.b16 %v389
    %v1426 = vunpack.c.l.b16 %v390
    %v1427 = vunpack.c.h.b16 %v390
    %v1428 = vunpack.c.l.b16 %v391
    %v1429 = vunpack.c.h.b16 %v391
    %v1430 = vunpack.c.l.b16 %v392
    %v1431 = vunpack.c.h.b16 %v392
    %v1432 = vunpack.c.l.b16 %v393
    %v1433 = vunpack.c.h.b16 %v393
    %v1434 = vunpack.c.l.b16 %v394
    %v1435 = vunpack.c.h.b16 %v394
    %v1436 = vunpack.c.l.b16 %v395
    %v1437 = vunpack.c.h.b16 %v395
    %v1438 = vunpack.c.l.b16 %v396
    %v1439 = vunpack.c.h.b16 %v396
    %v1440 = vunpack.c.l.b16 %v397
    %v1441 = vunpack.c.h.b16 %v397
    %v1442 = vunpack.c.l.b16 %v398
    %v1443 = vunpack.c.h.b16 %v398
    %v1444 = vunpack.c.l.b16 %v399
    %v1445 = vunpack.c.h.b16 %v399
    %v1446 = vunpack.c.l.b16 %v400
    %v1447 = vunpack.c.h.b16 %v400
    %v1448 = vunpack.c.l.b16 %v401
    %v1449 = vunpack.c.h.b16 %v401
    %v1450 = vunpack.c.l.b16 %v402
    %v1451 = vunpack.c.h.b16 %v402
    %v1452 = vunpack.c.l.b16 %v403
    %v1453 = vunpack.c.h.b16 %v403
    %v1454 = vunpack.c.l.b16 %v404
    %v1455 = vunpack.c.h.b16 %v404
    %v1456 = vunpack.c.l.b16 %v405
    %v1457 = vunpack.c.h.b16 %v405
    %v1458 = vunpack.c.l.b16 %v406
    %v1459 = vunpack.c.h.b16 %v406
    %v1460 = vunpack.c.l.b16 %v407
    %v1461 = vunpack.c.h.b16 %v407
    %v1462 = vunpack.c.l.b16 %v408
    %v1463 = vunpack.c.h.b16 %v408
    %v1464 = vunpack.c.l.b16 %v409
    %v1465 = vunpack.c.h.b16 %v409
    %v1466 = vunpack.c.l.b16 %v410
    %v1467 = vunpack.c.h.b16 %v410
    %v1468 = vunpack.c.l.b16 %v411
    %v1469 = vunpack.c.h.b16 %v411
    %v1470 = vunpack.c.l.b16 %v412
    %v1471 = vunpack.c.h.b16 %v412
    %v1472 = vunpack.c.l.b16 %v413
    %v1473 = vunpack.c.h.b16 %v413
    %v1474 = vunpack.c.l.b16 %v414
    %v1475 = vunpack.c.h.b16 %v414
    %v1476 = vunpack.c.l.b16 %v415
    %v1477 = vunpack.c.h.b16 %v415
    %v1478 = vunpack.c.l.b16 %v416
    %v1479 = vunpack.c.h.b16 %v416
    %v1480 = vunpack.c.l.b16 %v417
    %v1481 = vunpack.c.h.b16 %v417
    %v1482 = vunpack.c.l.b16 %v418
    %v1483 = vunpack.c.h.b16 %v418
    %v1484 = vunpack.c.l.b16 %v419
    %v1485 = vunpack.c.h.b16 %v419
    %v1486 = vunpack.c.l.b16 %v420
    %v1487 = vunpack.c.h.b16 %v420
    %v1488 = vunpack.c.l.b16 %v421
    %v1489 = vunpack.c.h.b16 %v421
    %v1490 = vunpack.c.l.b16 %v422
    %v1491 = vunpack.c.h.b16 %v422
    %v1492 = vunpack.c.l.b16 %v423
    %v1493 = vunpack.c.h.b16 %v423
    %v1494 = vunpack.c.l.b16 %v424
    %v1495 = vunpack.c.h.b16 %v424
    %v1496 = vunpack.c.l.b16 %v425
    %v1497 = vunpack.c.h.b16 %v425
    %v1498 = vunpack.c.l.b16 %v426
    %v1499 = vunpack.c.h.b16 %v426
    %v1500 = vunpack.c.l.b16 %v427
    %v1501 = vunpack.c.h.b16 %v427
    %v1502 = vunpack.c.l.b16 %v428
    %v1503 = vunpack.c.h.b16 %v428
    %v1504 = vunpack.c.l.b16 %v429
    %v1505 = vunpack.c.h.b16 %v429
    %v1506 = vunpack.c.l.b16 %v430
    %v1507 = vunpack.c.h.b16 %v430
    %v1508 = vunpack.c.l.b16 %v431
    %v1509 = vunpack.c.h.b16 %v431
    %v1510 = vunpack.c.l.b16 %v432
    %v1511 = vunpack.c.h.b16 %v432
    %v1512 = vunpack.c.l.b16 %v433
    %v1513 = vunpack.c.h.b16 %v433
    %v1514 = vunpack.c.l.b16 %v434
    %v1515 = vunpack.c.h.b16 %v434
    %v1516 = vunpack.c.l.b16 %v435
    %v1517 = vunpack.c.h.b16 %v435
    %v1518 = vunpack.c.l.b16 %v436
    %v1519 = vunpack.c.h.b16 %v436
    %v1520 = vunpack.c.l.b16 %v437
    %v1521 = vunpack.c.h.b16 %v437
    %v1522 = vunpack.c.l.b16 %v438
    %v1523 = vunpack.c.h.b16 %v438
    %v1524 = vunpack.c.l.b16 %v439
    %v1525 = vunpack.c.h.b16 %v439
    %v1526 = vunpack.c.l.b16 %v440
    %v1527 = vunpack.c.h.b16 %v440
    %v1528 = vunpack.c.l.b16 %v441
    %v1529 = vunpack.c.h.b16 %v441
    %v1530 = vunpack.c.l.b16 %v442
    %v1531 = vunpack.c.h.b16 %v442
    %v1532 = vunpack.c.l.b16 %v443
    %v1533 = vunpack.c.h.b16 %v443
    %v1534 = vunpack.c.l.b16 %v444
    %v1535 = vunpack.c.h.b16 %v444
    %v1536 = vunpack.c.l.b16 %v445
    %v1537 = vunpack.c.h.b16 %v445
    %v1538 = vunpack.c.l.b16 %v446
    %v1539 = vunpack.c.h.b16 %v446
    %v1540 = vunpack.c.l.b16 %v447
    %v1541 = vunpack.c.h.b16 %v447
    %v1542 = vunpack.c.l.b16 %v448
    %v1543 = vunpack.c.h.b16 %v448
    %v1544 = vunpack.c.l.b16 %v449
    %v1545 = vunpack.c.h.b16 %v449
    %v1546 = vunpack.c.l.b16 %v450
    %v1547 = vunpack.c.h.b16 %v450
    %v1548 = vunpack.c.l.b16 %v451
    %v1549 = vunpack.c.h.b16 %v451
    %v1550 = vunpack.c.l.b16 %v452
    %v1551 = vunpack.c.h.b16 %v452
    %v1552 = vunpack.c.l.b16 %v453
    %v1553 = vunpack.c.h.b16 %v453
    %v1554 = vunpack.c.l.b16 %v454
    %v1555 = vunpack.c.h.b16 %v454
    %v1556 = vunpack.c.l.b16 %v455
    %v1557 = vunpack.c.h.b16 %v455
    %v1558 = vunpack.c.l.b16 %v456
    %v1559 = vunpack.c.h.b16 %v456
    %v1560 = vunpack.c.l.b16 %v457
    %v1561 = vunpack.c.h.b16 %v457
    %v1562 = vunpack.c.l.b16 %v458
    %v1563 = vunpack.c.h.b16 %v458
    %v1564 = vunpack.c.l.b16 %v459
    %v1565 = vunpack.c.h.b16 %v459
    %v1566 = vunpack.c.l.b16 %v460
    %v1567 = vunpack.c.h.b16 %v460
    %v1568 = vunpack.c.l.b16 %v461
    %v1569 = vunpack.c.h.b16 %v461
    %v1570 = vunpack.c.l.b16 %v462
    %v1571 = vunpack.c.h.b16 %v462
    %v1572 = vunpack.c.l.b16 %v463
    %v1573 = vunpack.c.h.b16 %v463
    %v1574 = vunpack.c.l.b16 %v464
    %v1575 = vunpack.c.h.b16 %v464
    %v1576 = vunpack.c.l.b16 %v465
    %v1577 = vunpack.c.h.b16 %v465
    %v1578 = vunpack.c.l.b16 %v466
    %v1579 = vunpack.c.h.b16 %v466
    %v1580 = vunpack.c.l.b16 %v467
    %v1581 = vunpack.c.h.b16 %v467
    %v1582 = vunpack.c.l.b16 %v468
    %v1583 = vunpack.c.h.b16 %v468
    %v1584 = vunpack.c.l.b16 %v469
    %v1585 = vunpack.c.h.b16 %v469
    %v1586 = vunpack.c.l.b16 %v470
    %v1587 = vunpack.c.h.b16 %v470
    %v1588 = vunpack.c.l.b16 %v471
    %v1589 = vunpack.c.h.b16 %v471
    %v1590 = vunpack.c.l.b16 %v472
    %v1591 = vunpack.c.h.b16 %v472
    %v1592 = vunpack.c.l.b16 %v473
    %v1593 = vunpack.c.h.b16 %v473
    %v1594 = vunpack.c.l.b16 %v474
    %v1595 = vunpack.c.h.b16 %v474
    %v1596 = vunpack.c.l.b16 %v475
    %v1597 = vunpack.c.h.b16 %v475
    %v1598 = vunpack.c.l.b16 %v476
    %v1599 = vunpack.c.h.b16 %v476
    %v1600 = vunpack.c.l.b16 %v477
    %v1601 = vunpack.c.h.b16 %v477
    %v1602 = vunpack.c.l.b16 %v478
    %v1603 = vunpack.c.h.b16 %v478
    %v1604 = vunpack.c.l.b16 %v479
    %v1605 = vunpack.c.h.b16 %v479
    %v1606 = vunpack.c.l.b16 %v480
    %v1607 = vunpack.c.h.b16 %v480
    %v1608 = vunpack.c.l.b16 %v481
    %v1609 = vunpack.c.h.b16 %v481
    %v1610 = vunpack.c.l.b16 %v482
    %v1611 = vunpack.c.h.b16 %v482
    %v1612 = vunpack.c.l.b16 %v483
    %v1613 = vunpack.c.h.b16 %v483
    %v1614 = vunpack.c.l.b16 %v484
    %v1615 = vunpack.c.h.b16 %v484
    %v1616 = vunpack.c.l.b16 %v485
    %v1617 = vunpack.c.h.b16 %v485
    %v1618 = vunpack.c.l.b16 %v486
    %v1619 = vunpack.c.h.b16 %v486
    %v1620 = vunpack.c.l.b16 %v487
    %v1621 = vunpack.c.h.b16 %v487
    %v1622 = vunpack.c.l.b16 %v488
    %v1623 = vunpack.c.h.b16 %v488
    %v1624 = vunpack.c.l.b16 %v489
    %v1625 = vunpack.c.h.b16 %v489
    %v1626 = vunpack.c.l.b16 %v490
    %v1627 = vunpack.c.h.b16 %v490
    %v1628 = vunpack.c.l.b16 %v491
    %v1629 = vunpack.c.h.b16 %v491
    %v1630 = vunpack.c.l.b16 %v492
    %v1631 = vunpack.c.h.b16 %v492
    %v1632 = vunpack.c.l.b16 %v493
    %v1633 = vunpack.c.h.b16 %v493
    %v1634 = vunpack.c.l.b16 %v494
    %v1635 = vunpack.c.h.b16 %v494
    %v1636 = vunpack.c.l.b16 %v495
    %v1637 = vunpack.c.h.b16 %v495
    %v1638 = vunpack.c.l.b16 %v496
    %v1639 = vunpack.c.h.b16 %v496
    %v1640 = vunpack.c.l.b16 %v497
    %v1641 = vunpack.c.h.b16 %v497
    %v1642 = vunpack.c.l.b16 %v498
    %v1643 = vunpack.c.h.b16 %v498
    %v1644 = vunpack.c.l.b16 %v499
    %v1645 = vunpack.c.h.b16 %v499
    %v1646 = vunpack.c.l.b16 %v500
    %v1647 = vunpack.c.h.b16 %v500
    %v1648 = vunpack.c.l.b16 %v501
    %v1649 = vunpack.c.h.b16 %v501
    %v1650 = vunpack.c.l.b16 %v502
    %v1651 = vunpack.c.h.b16 %v502
    %v1652 = vunpack.c.l.b16 %v503
    %v1653 = vunpack.c.h.b16 %v503
    %v1654 = vunpack.c.l.b16 %v504
    %v1655 = vunpack.c.h.b16 %v504
    %v1656 = vunpack.c.l.b16 %v505
    %v1657 = vunpack.c.h.b16 %v505
    %v1658 = vpack.c.b16 %v898, %v890
    %v1659 = vpack.c.b16 %v899, %v891
    %v1660 = vpack.c.b16 %v900, %v892
    %v1661 = vpack.c.b16 %v901, %v893
    %v1662 = vpack.c.b16 %v902, %v894
    %v1663 = vpack.c.b16 %v903, %v895
    %v1664 = vpack.c.b16 %v904, %v896
    %v1665 = vpack.c.b16 %v905, %v897
    %v1666 = vpack.c.b16 %v914, %v906
    %v1667 = vpack.c.b16 %v915, %v907
    %v1668 = vpack.c.b16 %v916, %v908
    %v1669 = vpack.c.b16 %v917, %v909
    %v1670 = vpack.c.b16 %v918, %v910
    %v1671 = vpack.c.b16 %v919, %v911
    %v1672 = vpack.c.b16 %v920, %v912
    %v1673 = vpack.c.b16 %v921, %v913
    %v1674 = vpack.c.b16 %v930, %v922
    %v1675 = vpack.c.b16 %v931, %v923
    %v1676 = vpack.c.b16 %v932, %v924
    %v1677 = vpack.c.b16 %v933, %v925
    %v1678 = vpack.c.b16 %v934, %v926
    %v1679 = vpack.c.b16 %v935, %v927
    %v1680 = vpack.c.b16 %v936, %v928
    %v1681 = vpack.c.b16 %v937, %v929
    %v1682 = vpack.c.b16 %v946, %v938
    %v1683 = vpack.c.b16 %v947, %v939
    %v1684 = vpack.c.b16 %v948, %v940
    %v1685 = vpack.c.b16 %v949, %v941
    %v1686 = vpack.c.b16 %v950, %v942
    %v1687 = vpack.c.b16 %v951, %v943
    %v1688 = vpack.c.b16 %v952, %v944
    %v1689 = vpack.c.b16 %v953, %v945
    %v1690 = vpack.c.b16 %v962, %v954
    %v1691 = vpack.c.b16 %v963, %v955
    %v1692 = vpack.c.b16 %v964, %v956
    %v1693 = vpack.c.b16 %v965, %v957
    %v1694 = vpack.c.b16 %v966, %v958
    %v1695 = vpack.c.b16 %v967, %v959
    %v1696 = vpack.c.b16 %v968, %v960
    %v1697 = vpack.c.b16 %v969, %v961
    %v1698 = vpack.c.b16 %v978, %v970
    %v1699 = vpack.c.b16 %v979, %v971
    %v1700 = vpack.c.b16 %v980, %v972
    %v1701 = vpack.c.b16 %v981, %v973
    %v1702 = vpack.c.b16 %v982, %v974
    %v1703 = vpack.c.b16 %v983, %v975
    %v1704 = vpack.c.b16 %v984, %v976
    %v1705 = vpack.c.b16 %v985, %v977
    %v1706 = vpack.c.b16 %v994, %v986
    %v1707 = vpack.c.b16 %v995, %v987
    %v1708 = vpack.c.b16 %v996, %v988
    %v1709 = vpack.c.b16 %v997, %v989
    %v1710 = vpack.c.b16 %v998, %v990
    %v1711 = vpack.c.b16 %v999, %v991
    %v1712 = vpack.c.b16 %v1000, %v992
    %v1713 = vpack.c.b16 %v1001, %v993
    %v1714 = vpack.c.b16 %v1010, %v1002
    %v1715 = vpack.c.b16 %v1011, %v1003
    %v1716 = vpack.c.b16 %v1012, %v1004
    %v1717 = vpack.c.b16 %v1013, %v1005
    %v1718 = vpack.c.b16 %v1014, %v1006
    %v1719 = vpack.c.b16 %v1015, %v1007
    %v1720 = vpack.c.b16 %v1016, %v1008
    %v1721 = vpack.c.b16 %v1017, %v1009
    %v1722 = vpack.c.b16 %v1026, %v1018
    %v1723 = vpack.c.b16 %v1027, %v1019
    %v1724 = vpack.c.b16 %v1028, %v1020
    %v1725 = vpack.c.b16 %v1029, %v1021
    %v1726 = vpack.c.b16 %v1030, %v1022
    %v1727 = vpack.c.b16 %v1031, %v1023
    %v1728 = vpack.c.b16 %v1032, %v1024
    %v1729 = vpack.c.b16 %v1033, %v1025
    %v1730 = vpack.c.b16 %v1042, %v1034
    %v1731 = vpack.c.b16 %v1043, %v1035
    %v1732 = vpack.c.b16 %v1044, %v1036
    %v1733 = vpack.c.b16 %v1045, %v1037
    %v1734 = vpack.c.b16 %v1046, %v1038
    %v1735 = vpack.c.b16 %v1047, %v1039
    %v1736 = vpack.c.b16 %v1048, %v1040
    %v1737 = vpack.c.b16 %v1049, %v1041
    %v1738 = vpack.c.b16 %v1058, %v1050
    %v1739 = vpack.c.b16 %v1059, %v1051
    %v1740 = vpack.c.b16 %v1060, %v1052
    %v1741 = vpack.c.b16 %v1061, %v1053
    %v1742 = vpack.c.b16 %v1062, %v1054
    %v1743 = vpack.c.b16 %v1063, %v1055
    %v1744 = vpack.c.b16 %v1064, %v1056
    %v1745 = vpack.c.b16 %v1065, %v1057
    %v1746 = vpack.c.b16 %v1074, %v1066
    %v1747 = vpack.c.b16 %v1075, %v1067
    %v1748 = vpack.c.b16 %v1076, %v1068
    %v1749 = vpack.c.b16 %v1077, %v1069
    %v1750 = vpack.c.b16 %v1078, %v1070
    %v1751 = vpack.c.b16 %v1079, %v1071
    %v1752 = vpack.c.b16 %v1080, %v1072
    %v1753 = vpack.c.b16 %v1081, %v1073
    %v1754 = vpack.c.b16 %v1090, %v1082
    %v1755 = vpack.c.b16 %v1091, %v1083
    %v1756 = vpack.c.b16 %v1092, %v1084
    %v1757 = vpack.c.b16 %v1093, %v1085
    %v1758 = vpack.c.b16 %v1094, %v1086
    %v1759 = vpack.c.b16 %v1095, %v1087
    %v1760 = vpack.c.b16 %v1096, %v1088
    %v1761 = vpack.c.b16 %v1097, %v1089
    %v1762 = vpack.c.b16 %v1106, %v1098
    %v1763 = vpack.c.b16 %v1107, %v1099
    %v1764 = vpack.c.b16 %v1108, %v1100
    %v1765 = vpack.c.b16 %v1109, %v1101
    %v1766 = vpack.c.b16 %v1110, %v1102
    %v1767 = vpack.c.b16 %v1111, %v1103
    %v1768 = vpack.c.b16 %v1112, %v1104
    %v1769 = vpack.c.b16 %v1113, %v1105
    %v1770 = vpack.c.b16 %v1122, %v1114
    %v1771 = vpack.c.b16 %v1123, %v1115
    %v1772 = vpack.c.b16 %v1124, %v1116
    %v1773 = vpack.c.b16 %v1125, %v1117
    %v1774 = vpack.c.b16 %v1126, %v1118
    %v1775 = vpack.c.b16 %v1127, %v1119
    %v1776 = vpack.c.b16 %v1128, %v1120
    %v1777 = vpack.c.b16 %v1129, %v1121
    %v1778 = vpack.c.b16 %v1138, %v1130
    %v1779 = vpack.c.b16 %v1139, %v1131
    %v1780 = vpack.c.b16 %v1140, %v1132
    %v1781 = vpack.c.b16 %v1141, %v1133
    %v1782 = vpack.c.b16 %v1142, %v1134
    %v1783 = vpack.c.b16 %v1143, %v1135
    %v1784 = vpack.c.b16 %v1144, %v1136
    %v1785 = vpack.c.b16 %v1145, %v1137
    %v1786 = vpack.c.b16 %v1154, %v1146
    %v1787 = vpack.c.b16 %v1155, %v1147
    %v1788 = vpack.c.b16 %v1156, %v1148
    %v1789 = vpack.c.b16 %v1157, %v1149
    %v1790 = vpack.c.b16 %v1158, %v1150
    %v1791 = vpack.c.b16 %v1159, %v1151
    %v1792 = vpack.c.b16 %v1160, %v1152
    %v1793 = vpack.c.b16 %v1161, %v1153
    %v1794 = vpack.c.b16 %v1170, %v1162
    %v1795 = vpack.c.b16 %v1171, %v1163
    %v1796 = vpack.c.b16 %v1172, %v1164
    %v1797 = vpack.c.b16 %v1173, %v1165
    %v1798 = vpack.c.b16 %v1174, %v1166
    %v1799 = vpack.c.b16 %v1175, %v1167
    %v1800 = vpack.c.b16 %v1176, %v1168
    %v1801 = vpack.c.b16 %v1177, %v1169
    %v1802 = vpack.c.b16 %v1186, %v1178
    %v1803 = vpack.c.b16 %v1187, %v1179
    %v1804 = vpack.c.b16 %v1188, %v1180
    %v1805 = vpack.c.b16 %v1189, %v1181
    %v1806 = vpack.c.b16 %v1190, %v1182
    %v1807 = vpack.c.b16 %v1191, %v1183
    %v1808 = vpack.c.b16 %v1192, %v1184
    %v1809 = vpack.c.b16 %v1193, %v1185
    %v1810 = vpack.c.b16 %v1202, %v1194
    %v1811 = vpack.c.b16 %v1203, %v1195
    %v1812 = vpack.c.b16 %v1204, %v1196
    %v1813 = vpack.c.b16 %v1205, %v1197
    %v1814 = vpack.c.b16 %v1206, %v1198
    %v1815 = vpack.c.b16 %v1207, %v1199
    %v1816 = vpack.c.b16 %v1208, %v1200
    %v1817 = vpack.c.b16 %v1209, %v1201
    %v1818 = vpack.c.b16 %v1218, %v1210
    %v1819 = vpack.c.b16 %v1219, %v1211
    %v1820 = vpack.c.b16 %v1220, %v1212
    %v1821 = vpack.c.b16 %v1221, %v1213
    %v1822 = vpack.c.b16 %v1222, %v1214
    %v1823 = vpack.c.b16 %v1223, %v1215
    %v1824 = vpack.c.b16 %v1224, %v1216
    %v1825 = vpack.c.b16 %v1225, %v1217
    %v1826 = vpack.c.b16 %v1234, %v1226
    %v1827 = vpack.c.b16 %v1235, %v1227
    %v1828 = vpack.c.b16 %v1236, %v1228
    %v1829 = vpack.c.b16 %v1237, %v1229
    %v1830 = vpack.c.b16 %v1238, %v1230
    %v1831 = vpack.c.b16 %v1239, %v1231
    %v1832 = vpack.c.b16 %v1240, %v1232
    %v1833 = vpack.c.b16 %v1241, %v1233
    %v1834 = vpack.c.b16 %v1250, %v1242
    %v1835 = vpack.c.b16 %v1251, %v1243
    %v1836 = vpack.c.b16 %v1252, %v1244
    %v1837 = vpack.c.b16 %v1253, %v1245
    %v1838 = vpack.c.b16 %v1254, %v1246
    %v1839 = vpack.c.b16 %v1255, %v1247
    %v1840 = vpack.c.b16 %v1256, %v1248
    %v1841 = vpack.c.b16 %v1257, %v1249
    %v1842 = vpack.c.b16 %v1266, %v1258
    %v1843 = vpack.c.b16 %v1267, %v1259
    %v1844 = vpack.c.b16 %v1268, %v1260
    %v1845 = vpack.c.b16 %v1269, %v1261
    %v1846 = vpack.c.b16 %v1270, %v1262
    %v1847 = vpack.c.b16 %v1271, %v1263
    %v1848 = vpack.c.b16 %v1272, %v1264
    %v1849 = vpack.c.b16 %v1273, %v1265
    %v1850 = vpack.c.b16 %v1282, %v1274
    %v1851 = vpack.c.b16 %v1283, %v1275
    %v1852 = vpack.c.b16 %v1284, %v1276
    %v1853 = vpack.c.b16 %v1285, %v1277
    %v1854 = vpack.c.b16 %v1286, %v1278
    %v1855 = vpack.c.b16 %v1287, %v1279
    %v1856 = vpack.c.b16 %v1288, %v1280
    %v1857 = vpack.c.b16 %v1289, %v1281
    %v1858 = vpack.c.b16 %v1298, %v1290
    %v1859 = vpack.c.b16 %v1299, %v1291
    %v1860 = vpack.c.b16 %v1300, %v1292
    %v1861 = vpack.c.b16 %v1301, %v1293
    %v1862 = vpack.c.b16 %v1302, %v1294
    %v1863 = vpack.c.b16 %v1303, %v1295
    %v1864 = vpack.c.b16 %v1304, %v1296
    %v1865 = vpack.c.b16 %v1305, %v1297
    %v1866 = vpack.c.b16 %v1314, %v1306
    %v1867 = vpack.c.b16 %v1315, %v1307
    %v1868 = vpack.c.b16 %v1316, %v1308
    %v1869 = vpack.c.b16 %v1317, %v1309
    %v1870 = vpack.c.b16 %v1318, %v1310
    %v1871 = vpack.c.b16 %v1319, %v1311
    %v1872 = vpack.c.b16 %v1320, %v1312
    %v1873 = vpack.c.b16 %v1321, %v1313
    %v1874 = vpack.c.b16 %v1330, %v1322
    %v1875 = vpack.c.b16 %v1331, %v1323
    %v1876 = vpack.c.b16 %v1332, %v1324
    %v1877 = vpack.c.b16 %v1333, %v1325
    %v1878 = vpack.c.b16 %v1334, %v1326
    %v1879 = vpack.c.b16 %v1335, %v1327
    %v1880 = vpack.c.b16 %v1336, %v1328
    %v1881 = vpack.c.b16 %v1337, %v1329
    %v1882 = vpack.c.b16 %v1346, %v1338
    %v1883 = vpack.c.b16 %v1347, %v1339
    %v1884 = vpack.c.b16 %v1348, %v1340
    %v1885 = vpack.c.b16 %v1349, %v1341
    %v1886 = vpack.c.b16 %v1350, %v1342
    %v1887 = vpack.c.b16 %v1351, %v1343
    %v1888 = vpack.c.b16 %v1352, %v1344
    %v1889 = vpack.c.b16 %v1353, %v1345
    %v1890 = vpack.c.b16 %v1362, %v1354
    %v1891 = vpack.c.b16 %v1363, %v1355
    %v1892 = vpack.c.b16 %v1364, %v1356
    %v1893 = vpack.c.b16 %v1365, %v1357
    %v1894 = vpack.c.b16 %v1366, %v1358
    %v1895 = vpack.c.b16 %v1367, %v1359
    %v1896 = vpack.c.b16 %v1368, %v1360
    %v1897 = vpack.c.b16 %v1369, %v1361
    %v1898 = vpack.c.b16 %v1378, %v1370
    %v1899 = vpack.c.b16 %v1379, %v1371
    %v1900 = vpack.c.b16 %v1380, %v1372
    %v1901 = vpack.c.b16 %v1381, %v1373
    %v1902 = vpack.c.b16 %v1382, %v1374
    %v1903 = vpack.c.b16 %v1383, %v1375
    %v1904 = vpack.c.b16 %v1384, %v1376
    %v1905 = vpack.c.b16 %v1385, %v1377
    %v1906 = vpack.c.b16 %v1394, %v1386
    %v1907 = vpack.c.b16 %v1395, %v1387
    %v1908 = vpack.c.b16 %v1396, %v1388
    %v1909 = vpack.c.b16 %v1397, %v1389
    %v1910 = vpack.c.b16 %v1398, %v1390
    %v1911 = vpack.c.b16 %v1399, %v1391
    %v1912 = vpack.c.b16 %v1400, %v1392
    %v1913 = vpack.c.b16 %v1401, %v1393
    %v1914 = vpack.c.b16 %v1410, %v1402
    %v1915 = vpack.c.b16 %v1411, %v1403
    %v1916 = vpack.c.b16 %v1412, %v1404
    %v1917 = vpack.c.b16 %v1413, %v1405
    %v1918 = vpack.c.b16 %v1414, %v1406
    %v1919 = vpack.c.b16 %v1415, %v1407
    %v1920 = vpack.c.b16 %v1416, %v1408
    %v1921 = vpack.c.b16 %v1417, %v1409
    %v1922 = vpack.c.b16 %v1426, %v1418
    %v1923 = vpack.c.b16 %v1427, %v1419
    %v1924 = vpack.c.b16 %v1428, %v1420
    %v1925 = vpack.c.b16 %v1429, %v1421
    %v1926 = vpack.c.b16 %v1430, %v1422
    %v1927 = vpack.c.b16 %v1431, %v1423
    %v1928 = vpack.c.b16 %v1432, %v1424
    %v1929 = vpack.c.b16 %v1433, %v1425
    %v1930 = vpack.c.b16 %v1442, %v1434
    %v1931 = vpack.c.b16 %v1443, %v1435
    %v1932 = vpack.c.b16 %v1444, %v1436
    %v1933 = vpack.c.b16 %v1445, %v1437
    %v1934 = vpack.c.b16 %v1446, %v1438
    %v1935 = vpack.c.b16 %v1447, %v1439
    %v1936 = vpack.c.b16 %v1448, %v1440
    %v1937 = vpack.c.b16 %v1449, %v1441
    %v1938 = vpack.c.b16 %v1458, %v1450
    %v1939 = vpack.c.b16 %v1459, %v1451
    %v1940 = vpack.c.b16 %v1460, %v1452
    %v1941 = vpack.c.b16 %v1461, %v1453
    %v1942 = vpack.c.b16 %v1462, %v1454
    %v1943 = vpack.c.b16 %v1463, %v1455
    %v1944 = vpack.c.b16 %v1464, %v1456
    %v1945 = vpack.c.b16 %v1465, %v1457
    %v1946 = vpack.c.b16 %v1474, %v1466
    %v1947 = vpack.c.b16 %v1475, %v1467
    %v1948 = vpack.c.b16 %v1476, %v1468
    %v1949 = vpack.c.b16 %v1477, %v1469
    %v1950 = vpack.c.b16 %v1478, %v1470
    %v1951 = vpack.c.b16 %v1479, %v1471
    %v1952 = vpack.c.b16 %v1480, %v1472
    %v1953 = vpack.c.b16 %v1481, %v1473
    %v1954 = vpack.c.b16 %v1490, %v1482
    %v1955 = vpack.c.b16 %v1491, %v1483
    %v1956 = vpack.c.b16 %v1492, %v1484
    %v1957 = vpack.c.b16 %v1493, %v1485
    %v1958 = vpack.c.b16 %v1494, %v1486
    %v1959 = vpack.c.b16 %v1495, %v1487
    %v1960 = vpack.c.b16 %v1496, %v1488
    %v1961 = vpack.c.b16 %v1497, %v1489
    %v1962 = vpack.c.b16 %v1506, %v1498
    %v1963 = vpack.c.b16 %v1507, %v1499
    %v1964 = vpack.c.b16 %v1508, %v1500
    %v1965 = vpack.c.b16 %v1509, %v1501
    %v1966 = vpack.c.b16 %v1510, %v1502
    %v1967 = vpack.c.b16 %v1511, %v1503
    %v1968 = vpack.c.b16 %v1512, %v1504
    %v1969 = vpack.c.b16 %v1513, %v1505
    %v1970 = vpack.c.b16 %v1522, %v1514
    %v1971 = vpack.c.b16 %v1523, %v1515
    %v1972 = vpack.c.b16 %v1524, %v1516
    %v1973 = vpack.c.b16 %v1525, %v1517
    %v1974 = vpack.c.b16 %v1526, %v1518
    %v1975 = vpack.c.b16 %v1527, %v1519
    %v1976 = vpack.c.b16 %v1528, %v1520
    %v1977 = vpack.c.b16 %v1529, %v1521
    %v1978 = vpack.c.b16 %v1538, %v1530
    %v1979 = vpack.c.b16 %v1539, %v1531
    %v1980 = vpack.c.b16 %v1540, %v1532
    %v1981 = vpack.c.b16 %v1541, %v1533
    %v1982 = vpack.c.b16 %v1542, %v1534
    %v1983 = vpack.c.b16 %v1543, %v1535
    %v1984 = vpack.c.b16 %v1544, %v1536
    %v1985 = vpack.c.b16 %v1545, %v1537
    %v1986 = vpack.c.b16 %v1554, %v1546
    %v1987 = vpack.c.b16 %v1555, %v1547
    %v1988 = vpack.c.b16 %v1556, %v1548
    %v1989 = vpack.c.b16 %v1557, %v1549
    %v1990 = vpack.c.b16 %v1558, %v1550
    %v1991 = vpack.c.b16 %v1559, %v1551
    %v1992 = vpack.c.b16 %v1560, %v1552
    %v1993 = vpack.c.b16 %v1561, %v1553
    %v1994 = vpack.c.b16 %v1570, %v1562
    %v1995 = vpack.c.b16 %v1571, %v1563
    %v1996 = vpack.c.b16 %v1572, %v1564
    %v1997 = vpack.c.b16 %v1573, %v1565
    %v1998 = vpack.c.b16 %v1574, %v1566
    %v1999 = vpack.c.b16 %v1575, %v1567
    %v2000 = vpack.c.b16 %v1576, %v1568
    %v2001 = vpack.c.b16 %v1577, %v1569
    %v2002 = vpack.c.b16 %v1586, %v1578
    %v2003 = vpack.c.b16 %v1587, %v1579
    %v2004 = vpack.c.b16 %v1588, %v1580
    %v2005 = vpack.c.b16 %v1589, %v1581
    %v2006 = vpack.c.b16 %v1590, %v1582
    %v2007 = vpack.c.b16 %v1591, %v1583
    %v2008 = vpack.c.b16 %v1592, %v1584
    %v2009 = vpack.c.b16 %v1593, %v1585
    %v2010 = vpack.c.b16 %v1602, %v1594
    %v2011 = vpack.c.b16 %v1603, %v1595
    %v2012 = vpack.c.b16 %v1604, %v1596
    %v2013 = vpack.c.b16 %v1605, %v1597
    %v2014 = vpack.c.b16 %v1606, %v1598
    %v2015 = vpack.c.b16 %v1607, %v1599
    %v2016 = vpack.c.b16 %v1608, %v1600
    %v2017 = vpack.c.b16 %v1609, %v1601
    %v2018 = vpack.c.b16 %v1618, %v1610
    %v2019 = vpack.c.b16 %v1619, %v1611
    %v2020 = vpack.c.b16 %v1620, %v1612
    %v2021 = vpack.c.b16 %v1621, %v1613
    %v2022 = vpack.c.b16 %v1622, %v1614
    %v2023 = vpack.c.b16 %v1623, %v1615
    %v2024 = vpack.c.b16 %v1624, %v1616
    %v2025 = vpack.c.b16 %v1625, %v1617
    %v2026 = vpack.c.b16 %v1634, %v1626
    %v2027 = vpack.c.b16 %v1635, %v1627
    %v2028 = vpack.c.b16 %v1636, %v1628
    %v2029 = vpack.c.b16 %v1637, %v1629
    %v2030 = vpack.c.b16 %v1638, %v1630
    %v2031 = vpack.c.b16 %v1639, %v1631
    %v2032 = vpack.c.b16 %v1640, %v1632
    %v2033 = vpack.c.b16 %v1641, %v1633
    %v2034 = vpack.c.b16 %v1650, %v1642
    %v2035 = vpack.c.b16 %v1651, %v1643
    %v2036 = vpack.c.b16 %v1652, %v1644
    %v2037 = vpack.c.b16 %v1653, %v1645
    %v2038 = vpack.c.b16 %v1654, %v1646
    %v2039 = vpack.c.b16 %v1655, %v1647
    %v2040 = vpack.c.b16 %v1656, %v1648
    %v2041 = vpack.c.b16 %v1657, %v1649
    %2426 = vmatprep.subr.bf16.mxu0 %v1715
    %2427 = vmatpush1.bf16.msra.mxu0 %v1714
    %2428 = vmatprep.subr.bf16.mxu0 %v1707
    %2429 = vmatpush1.bf16.msra.mxu0 %v1706
    %2430 = vmatprep.subr.bf16.mxu0 %v1699
    %2431 = vmatpush1.bf16.msra.mxu0 %v1698
    %2432 = vmatprep.subr.bf16.mxu0 %v1691
    %2433 = vmatpush1.bf16.msra.mxu0 %v1690
    %2434 = vmatprep.subr.bf16.mxu0 %v1683
    %2435 = vmatpush1.bf16.msra.mxu0 %v1682
    %2436 = vmatprep.subr.bf16.mxu0 %v1675
    %2437 = vmatpush1.bf16.msra.mxu0 %v1674
    %2438 = vmatprep.subr.bf16.mxu0 %v1667
    %2439 = vmatpush1.bf16.msra.mxu0 %v1666
    %2440 = vmatprep.subr.bf16.mxu0 %v1659
    %2441 = vmatpush1.bf16.msra.mxu0 %v1658
    %2442 = vmatprep.subr.bf16.mxu0 %v1779
    %2443 = vmatpush2.bf16.msra.mxu0 %v1778
    %2444 = vmatprep.subr.bf16.mxu0 %v1771
    %2445 = vmatpush2.bf16.msra.mxu0 %v1770
    %2446 = vmatprep.subr.bf16.mxu0 %v1763
    %2447 = vmatpush2.bf16.msra.mxu0 %v1762
    %2448 = vmatprep.subr.bf16.mxu0 %v1755
    %2449 = vmatpush2.bf16.msra.mxu0 %v1754
    %2450 = vmatprep.subr.bf16.mxu0 %v1747
    %2451 = vmatpush2.bf16.msra.mxu0 %v1746
    %2452 = vmatprep.subr.bf16.mxu0 %v1739
    %2453 = vmatpush2.bf16.msra.mxu0 %v1738
    %2454 = vmatprep.subr.bf16.mxu0 %v1731
    %2455 = vmatpush2.bf16.msra.mxu0 %v1730
    %2456 = vmatprep.subr.bf16.mxu0 %v1723
    %2457 = vmatpush2.bf16.msra.mxu0 %v1722
    %2458 = vmatprep.mubr.bf16.mxu0 %v117
    %2459 = vmatmul.mubr.bf16.gmra.mxu0 %v116
    %v2460 = vpop.f32.mrf.mxu0
    %v2461 = vadd.f32 0.0, %v2460
    %v2462 = vpop.f32.mrf.mxu0
    %v2463 = vadd.f32 0.0, %v2462
    %v2464 = vpop.f32.mrf.mxu0
    %v2465 = vpop.f32.mrf.mxu0
    %2466 = vdwg.mxu0
    %2467 = vmatprep.subr.bf16.mxu0 %v1843
    %2468 = vmatpush1.bf16.msra.mxu0 %v1842
    %2469 = vmatprep.subr.bf16.mxu0 %v1835
    %2470 = vmatpush1.bf16.msra.mxu0 %v1834
    %2471 = vmatprep.subr.bf16.mxu0 %v1827
    %2472 = vmatpush1.bf16.msra.mxu0 %v1826
    %2473 = vmatprep.subr.bf16.mxu0 %v1819
    %2474 = vmatpush1.bf16.msra.mxu0 %v1818
    %2475 = vmatprep.subr.bf16.mxu0 %v1811
    %2476 = vmatpush1.bf16.msra.mxu0 %v1810
    %2477 = vmatprep.subr.bf16.mxu0 %v1803
    %2478 = vmatpush1.bf16.msra.mxu0 %v1802
    %2479 = vmatprep.subr.bf16.mxu0 %v1795
    %2480 = vmatpush1.bf16.msra.mxu0 %v1794
    %2481 = vmatprep.subr.bf16.mxu0 %v1787
    %2482 = vmatpush1.bf16.msra.mxu0 %v1786
    %2483 = vmatprep.subr.bf16.mxu0 %v1907
    %2484 = vmatpush2.bf16.msra.mxu0 %v1906
    %2485 = vmatprep.subr.bf16.mxu0 %v1899
    %2486 = vmatpush2.bf16.msra.mxu0 %v1898
    %2487 = vmatprep.subr.bf16.mxu0 %v1891
    %2488 = vmatpush2.bf16.msra.mxu0 %v1890
    %2489 = vmatprep.subr.bf16.mxu0 %v1883
    %2490 = vmatpush2.bf16.msra.mxu0 %v1882
    %2491 = vmatprep.subr.bf16.mxu0 %v1875
    %2492 = vmatpush2.bf16.msra.mxu0 %v1874
    %2493 = vmatprep.subr.bf16.mxu0 %v1867
    %2494 = vmatpush2.bf16.msra.mxu0 %v1866
    %2495 = vmatprep.subr.bf16.mxu0 %v1859
    %2496 = vmatpush2.bf16.msra.mxu0 %v1858
    %2497 = vmatprep.subr.bf16.mxu0 %v1851
    %2498 = vmatpush2.bf16.msra.mxu0 %v1850
    %2499 = vmatprep.mubr.bf16.mxu0 %v119
    %2500 = vmatmul.mubr.bf16.gmra.mxu0 %v118
    %v2501 = vpop.f32.mrf.mxu0
    %v2502 = vadd.f32 %v2461, %v2501
    %v2503 = vpop.f32.mrf.mxu0
    %v2504 = vadd.f32 %v2463, %v2503
    %v2505 = vpop.f32.mrf.mxu0
    %v2506 = vpop.f32.mrf.mxu0
    %2507 = vdwg.mxu0
    %2508 = vmatprep.subr.bf16.mxu0 %v1971
    %2509 = vmatpush1.bf16.msra.mxu0 %v1970
    %2510 = vmatprep.subr.bf16.mxu0 %v1963
    %2511 = vmatpush1.bf16.msra.mxu0 %v1962
    %2512 = vmatprep.subr.bf16.mxu0 %v1955
    %2513 = vmatpush1.bf16.msra.mxu0 %v1954
    %2514 = vmatprep.subr.bf16.mxu0 %v1947
    %2515 = vmatpush1.bf16.msra.mxu0 %v1946
    %2516 = vmatprep.subr.bf16.mxu0 %v1939
    %2517 = vmatpush1.bf16.msra.mxu0 %v1938
    %2518 = vmatprep.subr.bf16.mxu0 %v1931
    %2519 = vmatpush1.bf16.msra.mxu0 %v1930
    %2520 = vmatprep.subr.bf16.mxu0 %v1923
    %2521 = vmatpush1.bf16.msra.mxu0 %v1922
    %2522 = vmatprep.subr.bf16.mxu0 %v1915
    %2523 = vmatpush1.bf16.msra.mxu0 %v1914
    %2524 = vmatprep.subr.bf16.mxu0 %v2035
    %2525 = vmatpush2.bf16.msra.mxu0 %v2034
    %2526 = vmatprep.subr.bf16.mxu0 %v2027
    %2527 = vmatpush2.bf16.msra.mxu0 %v2026
    %2528 = vmatprep.subr.bf16.mxu0 %v2019
    %2529 = vmatpush2.bf16.msra.mxu0 %v2018
    %2530 = vmatprep.subr.bf16.mxu0 %v2011
    %2531 = vmatpush2.bf16.msra.mxu0 %v2010
    %2532 = vmatprep.subr.bf16.mxu0 %v2003
    %2533 = vmatpush2.bf16.msra.mxu0 %v2002
    %2534 = vmatprep.subr.bf16.mxu0 %v1995
    %2535 = vmatpush2.bf16.msra.mxu0 %v1994
    %2536 = vmatprep.subr.bf16.mxu0 %v1987
    %2537 = vmatpush2.bf16.msra.mxu0 %v1986
    %2538 = vmatprep.subr.bf16.mxu0 %v1979
    %2539 = vmatpush2.bf16.msra.mxu0 %v1978
    %2540 = vmatprep.mubr.bf16.mxu0 %v121
    %2541 = vmatmul.mubr.bf16.gmra.mxu0 %v120
    %v2542 = vpop.f32.mrf.mxu0
    %v2543 = vadd.f32 %v2502, %v2542
    %v2544 = vpop.f32.mrf.mxu0
    %v2545 = vadd.f32 %v2504, %v2544
    %v2546 = vpop.f32.mrf.mxu0
    %v2547 = vpop.f32.mrf.mxu0
    %2548 = vdwg.mxu0
    %2549 = vmatprep.subr.bf16.mxu0 %v1717
    %2550 = vmatpush1.bf16.msra.mxu0 %v1716
    %2551 = vmatprep.subr.bf16.mxu0 %v1709
    %2552 = vmatpush1.bf16.msra.mxu0 %v1708
    %2553 = vmatprep.subr.bf16.mxu0 %v1701
    %2554 = vmatpush1.bf16.msra.mxu0 %v1700
    %2555 = vmatprep.subr.bf16.mxu0 %v1693
    %2556 = vmatpush1.bf16.msra.mxu0 %v1692
    %2557 = vmatprep.subr.bf16.mxu0 %v1685
    %2558 = vmatpush1.bf16.msra.mxu0 %v1684
    %2559 = vmatprep.subr.bf16.mxu0 %v1677
    %2560 = vmatpush1.bf16.msra.mxu0 %v1676
    %2561 = vmatprep.subr.bf16.mxu0 %v1669
    %2562 = vmatpush1.bf16.msra.mxu0 %v1668
    %2563 = vmatprep.subr.bf16.mxu0 %v1661
    %2564 = vmatpush1.bf16.msra.mxu0 %v1660
    %2565 = vmatprep.subr.bf16.mxu0 %v1781
    %2566 = vmatpush2.bf16.msra.mxu0 %v1780
    %2567 = vmatprep.subr.bf16.mxu0 %v1773
    %2568 = vmatpush2.bf16.msra.mxu0 %v1772
    %2569 = vmatprep.subr.bf16.mxu0 %v1765
    %2570 = vmatpush2.bf16.msra.mxu0 %v1764
    %2571 = vmatprep.subr.bf16.mxu0 %v1757
    %2572 = vmatpush2.bf16.msra.mxu0 %v1756
    %2573 = vmatprep.subr.bf16.mxu0 %v1749
    %2574 = vmatpush2.bf16.msra.mxu0 %v1748
    %2575 = vmatprep.subr.bf16.mxu0 %v1741
    %2576 = vmatpush2.bf16.msra.mxu0 %v1740
    %2577 = vmatprep.subr.bf16.mxu0 %v1733
    %2578 = vmatpush2.bf16.msra.mxu0 %v1732
    %2579 = vmatprep.subr.bf16.mxu0 %v1725
    %2580 = vmatpush2.bf16.msra.mxu0 %v1724
    %2581 = vmatprep.mubr.bf16.mxu0 %v117
    %2582 = vmatmul.mubr.bf16.gmra.mxu0 %v116
    %v2583 = vpop.f32.mrf.mxu0
    %v2584 = vadd.f32 0.0, %v2583
    %v2585 = vpop.f32.mrf.mxu0
    %v2586 = vadd.f32 0.0, %v2585
    %v2587 = vpop.f32.mrf.mxu0
    %v2588 = vpop.f32.mrf.mxu0
    %2589 = vdwg.mxu0
    %2590 = vmatprep.subr.bf16.mxu0 %v1845
    %2591 = vmatpush1.bf16.msra.mxu0 %v1844
    %2592 = vmatprep.subr.bf16.mxu0 %v1837
    %2593 = vmatpush1.bf16.msra.mxu0 %v1836
    %2594 = vmatprep.subr.bf16.mxu0 %v1829
    %2595 = vmatpush1.bf16.msra.mxu0 %v1828
    %2596 = vmatprep.subr.bf16.mxu0 %v1821
    %2597 = vmatpush1.bf16.msra.mxu0 %v1820
    %2598 = vmatprep.subr.bf16.mxu0 %v1813
    %2599 = vmatpush1.bf16.msra.mxu0 %v1812
    %2600 = vmatprep.subr.bf16.mxu0 %v1805
    %2601 = vmatpush1.bf16.msra.mxu0 %v1804
    %2602 = vmatprep.subr.bf16.mxu0 %v1797
    %2603 = vmatpush1.bf16.msra.mxu0 %v1796
    %2604 = vmatprep.subr.bf16.mxu0 %v1789
    %2605 = vmatpush1.bf16.msra.mxu0 %v1788
    %2606 = vmatprep.subr.bf16.mxu0 %v1909
    %2607 = vmatpush2.bf16.msra.mxu0 %v1908
    %2608 = vmatprep.subr.bf16.mxu0 %v1901
    %2609 = vmatpush2.bf16.msra.mxu0 %v1900
    %2610 = vmatprep.subr.bf16.mxu0 %v1893
    %2611 = vmatpush2.bf16.msra.mxu0 %v1892
    %2612 = vmatprep.subr.bf16.mxu0 %v1885
    %2613 = vmatpush2.bf16.msra.mxu0 %v1884
    %2614 = vmatprep.subr.bf16.mxu0 %v1877
    %2615 = vmatpush2.bf16.msra.mxu0 %v1876
    %2616 = vmatprep.subr.bf16.mxu0 %v1869
    %2617 = vmatpush2.bf16.msra.mxu0 %v1868
    %2618 = vmatprep.subr.bf16.mxu0 %v1861
    %2619 = vmatpush2.bf16.msra.mxu0 %v1860
    %2620 = vmatprep.subr.bf16.mxu0 %v1853
    %2621 = vmatpush2.bf16.msra.mxu0 %v1852
    %2622 = vmatprep.mubr.bf16.mxu0 %v119
    %2623 = vmatmul.mubr.bf16.gmra.mxu0 %v118
    %v2624 = vpop.f32.mrf.mxu0
    %v2625 = vadd.f32 %v2584, %v2624
    %v2626 = vpop.f32.mrf.mxu0
    %v2627 = vadd.f32 %v2586, %v2626
    %v2628 = vpop.f32.mrf.mxu0
    %v2629 = vpop.f32.mrf.mxu0
    %2630 = vdwg.mxu0
    %2631 = vmatprep.subr.bf16.mxu0 %v1973
    %2632 = vmatpush1.bf16.msra.mxu0 %v1972
    %2633 = vmatprep.subr.bf16.mxu0 %v1965
    %2634 = vmatpush1.bf16.msra.mxu0 %v1964
    %2635 = vmatprep.subr.bf16.mxu0 %v1957
    %2636 = vmatpush1.bf16.msra.mxu0 %v1956
    %2637 = vmatprep.subr.bf16.mxu0 %v1949
    %2638 = vmatpush1.bf16.msra.mxu0 %v1948
    %2639 = vmatprep.subr.bf16.mxu0 %v1941
    %2640 = vmatpush1.bf16.msra.mxu0 %v1940
    %2641 = vmatprep.subr.bf16.mxu0 %v1933
    %2642 = vmatpush1.bf16.msra.mxu0 %v1932
    %2643 = vmatprep.subr.bf16.mxu0 %v1925
    %2644 = vmatpush1.bf16.msra.mxu0 %v1924
    %2645 = vmatprep.subr.bf16.mxu0 %v1917
    %2646 = vmatpush1.bf16.msra.mxu0 %v1916
    %2647 = vmatprep.subr.bf16.mxu0 %v2037
    %2648 = vmatpush2.bf16.msra.mxu0 %v2036
    %2649 = vmatprep.subr.bf16.mxu0 %v2029
    %2650 = vmatpush2.bf16.msra.mxu0 %v2028
    %2651 = vmatprep.subr.bf16.mxu0 %v2021
    %2652 = vmatpush2.bf16.msra.mxu0 %v2020
    %2653 = vmatprep.subr.bf16.mxu0 %v2013
    %2654 = vmatpush2.bf16.msra.mxu0 %v2012
    %2655 = vmatprep.subr.bf16.mxu0 %v2005
    %2656 = vmatpush2.bf16.msra.mxu0 %v2004
    %2657 = vmatprep.subr.bf16.mxu0 %v1997
    %2658 = vmatpush2.bf16.msra.mxu0 %v1996
    %2659 = vmatprep.subr.bf16.mxu0 %v1989
    %2660 = vmatpush2.bf16.msra.mxu0 %v1988
    %2661 = vmatprep.subr.bf16.mxu0 %v1981
    %2662 = vmatpush2.bf16.msra.mxu0 %v1980
    %2663 = vmatprep.mubr.bf16.mxu0 %v121
    %2664 = vmatmul.mubr.bf16.gmra.mxu0 %v120
    %v2665 = vpop.f32.mrf.mxu0
    %v2666 = vadd.f32 %v2625, %v2665
    %v2667 = vpop.f32.mrf.mxu0
    %v2668 = vadd.f32 %v2627, %v2667
    %v2669 = vpop.f32.mrf.mxu0
    %v2670 = vpop.f32.mrf.mxu0
    %2671 = vdwg.mxu0
    %2672 = vmatprep.subr.bf16.mxu0 %v1719
    %2673 = vmatpush1.bf16.msra.mxu0 %v1718
    %2674 = vmatprep.subr.bf16.mxu0 %v1711
    %2675 = vmatpush1.bf16.msra.mxu0 %v1710
    %2676 = vmatprep.subr.bf16.mxu0 %v1703
    %2677 = vmatpush1.bf16.msra.mxu0 %v1702
    %2678 = vmatprep.subr.bf16.mxu0 %v1695
    %2679 = vmatpush1.bf16.msra.mxu0 %v1694
    %2680 = vmatprep.subr.bf16.mxu0 %v1687
    %2681 = vmatpush1.bf16.msra.mxu0 %v1686
    %2682 = vmatprep.subr.bf16.mxu0 %v1679
    %2683 = vmatpush1.bf16.msra.mxu0 %v1678
    %2684 = vmatprep.subr.bf16.mxu0 %v1671
    %2685 = vmatpush1.bf16.msra.mxu0 %v1670
    %2686 = vmatprep.subr.bf16.mxu0 %v1663
    %2687 = vmatpush1.bf16.msra.mxu0 %v1662
    %2688 = vmatprep.subr.bf16.mxu0 %v1783
    %2689 = vmatpush2.bf16.msra.mxu0 %v1782
    %2690 = vmatprep.subr.bf16.mxu0 %v1775
    %2691 = vmatpush2.bf16.msra.mxu0 %v1774
    %2692 = vmatprep.subr.bf16.mxu0 %v1767
    %2693 = vmatpush2.bf16.msra.mxu0 %v1766
    %2694 = vmatprep.subr.bf16.mxu0 %v1759
    %2695 = vmatpush2.bf16.msra.mxu0 %v1758
    %2696 = vmatprep.subr.bf16.mxu0 %v1751
    %2697 = vmatpush2.bf16.msra.mxu0 %v1750
    %2698 = vmatprep.subr.bf16.mxu0 %v1743
    %2699 = vmatpush2.bf16.msra.mxu0 %v1742
    %2700 = vmatprep.subr.bf16.mxu0 %v1735
    %2701 = vmatpush2.bf16.msra.mxu0 %v1734
    %2702 = vmatprep.subr.bf16.mxu0 %v1727
    %2703 = vmatpush2.bf16.msra.mxu0 %v1726
    %2704 = vmatprep.mubr.bf16.mxu0 %v117
    %2705 = vmatmul.mubr.bf16.gmra.mxu0 %v116
    %v2706 = vpop.f32.mrf.mxu0
    %v2707 = vadd.f32 0.0, %v2706
    %v2708 = vpop.f32.mrf.mxu0
    %v2709 = vadd.f32 0.0, %v2708
    %v2710 = vpop.f32.mrf.mxu0
    %v2711 = vpop.f32.mrf.mxu0
    %2712 = vdwg.mxu0
    %2713 = vmatprep.subr.bf16.mxu0 %v1847
    %2714 = vmatpush1.bf16.msra.mxu0 %v1846
    %2715 = vmatprep.subr.bf16.mxu0 %v1839
    %2716 = vmatpush1.bf16.msra.mxu0 %v1838
    %2717 = vmatprep.subr.bf16.mxu0 %v1831
    %2718 = vmatpush1.bf16.msra.mxu0 %v1830
    %2719 = vmatprep.subr.bf16.mxu0 %v1823
    %2720 = vmatpush1.bf16.msra.mxu0 %v1822
    %2721 = vmatprep.subr.bf16.mxu0 %v1815
    %2722 = vmatpush1.bf16.msra.mxu0 %v1814
    %2723 = vmatprep.subr.bf16.mxu0 %v1807
    %2724 = vmatpush1.bf16.msra.mxu0 %v1806
    %2725 = vmatprep.subr.bf16.mxu0 %v1799
    %2726 = vmatpush1.bf16.msra.mxu0 %v1798
    %2727 = vmatprep.subr.bf16.mxu0 %v1791
    %2728 = vmatpush1.bf16.msra.mxu0 %v1790
    %2729 = vmatprep.subr.bf16.mxu0 %v1911
    %2730 = vmatpush2.bf16.msra.mxu0 %v1910
    %2731 = vmatprep.subr.bf16.mxu0 %v1903
    %2732 = vmatpush2.bf16.msra.mxu0 %v1902
    %2733 = vmatprep.subr.bf16.mxu0 %v1895
    %2734 = vmatpush2.bf16.msra.mxu0 %v1894
    %2735 = vmatprep.subr.bf16.mxu0 %v1887
    %2736 = vmatpush2.bf16.msra.mxu0 %v1886
    %2737 = vmatprep.subr.bf16.mxu0 %v1879
    %2738 = vmatpush2.bf16.msra.mxu0 %v1878
    %2739 = vmatprep.subr.bf16.mxu0 %v1871
    %2740 = vmatpush2.bf16.msra.mxu0 %v1870
    %2741 = vmatprep.subr.bf16.mxu0 %v1863
    %2742 = vmatpush2.bf16.msra.mxu0 %v1862
    %2743 = vmatprep.subr.bf16.mxu0 %v1855
    %2744 = vmatpush2.bf16.msra.mxu0 %v1854
    %2745 = vmatprep.mubr.bf16.mxu0 %v119
    %2746 = vmatmul.mubr.bf16.gmra.mxu0 %v118
    %v2747 = vpop.f32.mrf.mxu0
    %v2748 = vadd.f32 %v2707, %v2747
    %v2749 = vpop.f32.mrf.mxu0
    %v2750 = vadd.f32 %v2709, %v2749
    %v2751 = vpop.f32.mrf.mxu0
    %v2752 = vpop.f32.mrf.mxu0
    %2753 = vdwg.mxu0
    %2754 = vmatprep.subr.bf16.mxu0 %v1975
    %2755 = vmatpush1.bf16.msra.mxu0 %v1974
    %2756 = vmatprep.subr.bf16.mxu0 %v1967
    %2757 = vmatpush1.bf16.msra.mxu0 %v1966
    %2758 = vmatprep.subr.bf16.mxu0 %v1959
    %2759 = vmatpush1.bf16.msra.mxu0 %v1958
    %2760 = vmatprep.subr.bf16.mxu0 %v1951
    %2761 = vmatpush1.bf16.msra.mxu0 %v1950
    %2762 = vmatprep.subr.bf16.mxu0 %v1943
    %2763 = vmatpush1.bf16.msra.mxu0 %v1942
    %2764 = vmatprep.subr.bf16.mxu0 %v1935
    %2765 = vmatpush1.bf16.msra.mxu0 %v1934
    %2766 = vmatprep.subr.bf16.mxu0 %v1927
    %2767 = vmatpush1.bf16.msra.mxu0 %v1926
    %2768 = vmatprep.subr.bf16.mxu0 %v1919
    %2769 = vmatpush1.bf16.msra.mxu0 %v1918
    %2770 = vmatprep.subr.bf16.mxu0 %v2039
    %2771 = vmatpush2.bf16.msra.mxu0 %v2038
    %2772 = vmatprep.subr.bf16.mxu0 %v2031
    %2773 = vmatpush2.bf16.msra.mxu0 %v2030
    %2774 = vmatprep.subr.bf16.mxu0 %v2023
    %2775 = vmatpush2.bf16.msra.mxu0 %v2022
    %2776 = vmatprep.subr.bf16.mxu0 %v2015
    %2777 = vmatpush2.bf16.msra.mxu0 %v2014
    %2778 = vmatprep.subr.bf16.mxu0 %v2007
    %2779 = vmatpush2.bf16.msra.mxu0 %v2006
    %2780 = vmatprep.subr.bf16.mxu0 %v1999
    %2781 = vmatpush2.bf16.msra.mxu0 %v1998
    %2782 = vmatprep.subr.bf16.mxu0 %v1991
    %2783 = vmatpush2.bf16.msra.mxu0 %v1990
    %2784 = vmatprep.subr.bf16.mxu0 %v1983
    %2785 = vmatpush2.bf16.msra.mxu0 %v1982
    %2786 = vmatprep.mubr.bf16.mxu0 %v121
    %2787 = vmatmul.mubr.bf16.gmra.mxu0 %v120
    %v2788 = vpop.f32.mrf.mxu0
    %v2789 = vadd.f32 %v2748, %v2788
    %v2790 = vpop.f32.mrf.mxu0
    %v2791 = vadd.f32 %v2750, %v2790
    %v2792 = vpop.f32.mrf.mxu0
    %v2793 = vpop.f32.mrf.mxu0
    %2794 = vdwg.mxu0
    %2795 = vmatprep.subr.bf16.mxu0 %v1721
    %2796 = vmatpush1.bf16.msra.mxu0 %v1720
    %2797 = vmatprep.subr.bf16.mxu0 %v1713
    %2798 = vmatpush1.bf16.msra.mxu0 %v1712
    %2799 = vmatprep.subr.bf16.mxu0 %v1705
    %2800 = vmatpush1.bf16.msra.mxu0 %v1704
    %2801 = vmatprep.subr.bf16.mxu0 %v1697
    %2802 = vmatpush1.bf16.msra.mxu0 %v1696
    %2803 = vmatprep.subr.bf16.mxu0 %v1689
    %2804 = vmatpush1.bf16.msra.mxu0 %v1688
    %2805 = vmatprep.subr.bf16.mxu0 %v1681
    %2806 = vmatpush1.bf16.msra.mxu0 %v1680
    %2807 = vmatprep.subr.bf16.mxu0 %v1673
    %2808 = vmatpush1.bf16.msra.mxu0 %v1672
    %2809 = vmatprep.subr.bf16.mxu0 %v1665
    %2810 = vmatpush1.bf16.msra.mxu0 %v1664
    %2811 = vmatprep.subr.bf16.mxu0 %v1785
    %2812 = vmatpush2.bf16.msra.mxu0 %v1784
    %2813 = vmatprep.subr.bf16.mxu0 %v1777
    %2814 = vmatpush2.bf16.msra.mxu0 %v1776
    %2815 = vmatprep.subr.bf16.mxu0 %v1769
    %2816 = vmatpush2.bf16.msra.mxu0 %v1768
    %2817 = vmatprep.subr.bf16.mxu0 %v1761
    %2818 = vmatpush2.bf16.msra.mxu0 %v1760
    %2819 = vmatprep.subr.bf16.mxu0 %v1753
    %2820 = vmatpush2.bf16.msra.mxu0 %v1752
    %2821 = vmatprep.subr.bf16.mxu0 %v1745
    %2822 = vmatpush2.bf16.msra.mxu0 %v1744
    %2823 = vmatprep.subr.bf16.mxu0 %v1737
    %2824 = vmatpush2.bf16.msra.mxu0 %v1736
    %2825 = vmatprep.subr.bf16.mxu0 %v1729
    %2826 = vmatpush2.bf16.msra.mxu0 %v1728
    %2827 = vmatprep.mubr.bf16.mxu0 %v117
    %2828 = vmatmul.mubr.bf16.gmra.mxu0 %v116
    %v2829 = vpop.f32.mrf.mxu0
    %v2830 = vadd.f32 0.0, %v2829
    %v2831 = vpop.f32.mrf.mxu0
    %v2832 = vadd.f32 0.0, %v2831
    %v2833 = vpop.f32.mrf.mxu0
    %v2834 = vpop.f32.mrf.mxu0
    %2835 = vdwg.mxu0
    %2836 = vmatprep.subr.bf16.mxu0 %v1849
    %2837 = vmatpush1.bf16.msra.mxu0 %v1848
    %2838 = vmatprep.subr.bf16.mxu0 %v1841
    %2839 = vmatpush1.bf16.msra.mxu0 %v1840
    %2840 = vmatprep.subr.bf16.mxu0 %v1833
    %2841 = vmatpush1.bf16.msra.mxu0 %v1832
    %2842 = vmatprep.subr.bf16.mxu0 %v1825
    %2843 = vmatpush1.bf16.msra.mxu0 %v1824
    %2844 = vmatprep.subr.bf16.mxu0 %v1817
    %2845 = vmatpush1.bf16.msra.mxu0 %v1816
    %2846 = vmatprep.subr.bf16.mxu0 %v1809
    %2847 = vmatpush1.bf16.msra.mxu0 %v1808
    %2848 = vmatprep.subr.bf16.mxu0 %v1801
    %2849 = vmatpush1.bf16.msra.mxu0 %v1800
    %2850 = vmatprep.subr.bf16.mxu0 %v1793
    %2851 = vmatpush1.bf16.msra.mxu0 %v1792
    %2852 = vmatprep.subr.bf16.mxu0 %v1913
    %2853 = vmatpush2.bf16.msra.mxu0 %v1912
    %2854 = vmatprep.subr.bf16.mxu0 %v1905
    %2855 = vmatpush2.bf16.msra.mxu0 %v1904
    %2856 = vmatprep.subr.bf16.mxu0 %v1897
    %2857 = vmatpush2.bf16.msra.mxu0 %v1896
    %2858 = vmatprep.subr.bf16.mxu0 %v1889
    %2859 = vmatpush2.bf16.msra.mxu0 %v1888
    %2860 = vmatprep.subr.bf16.mxu0 %v1881
    %2861 = vmatpush2.bf16.msra.mxu0 %v1880
    %2862 = vmatprep.subr.bf16.mxu0 %v1873
    %2863 = vmatpush2.bf16.msra.mxu0 %v1872
    %2864 = vmatprep.subr.bf16.mxu0 %v1865
    %2865 = vmatpush2.bf16.msra.mxu0 %v1864
    %2866 = vmatprep.subr.bf16.mxu0 %v1857
    %2867 = vmatpush2.bf16.msra.mxu0 %v1856
    %2868 = vmatprep.mubr.bf16.mxu0 %v119
    %2869 = vmatmul.mubr.bf16.gmra.mxu0 %v118
    %v2870 = vpop.f32.mrf.mxu0
    %v2871 = vadd.f32 %v2830, %v2870
    %v2872 = vpop.f32.mrf.mxu0
    %v2873 = vadd.f32 %v2832, %v2872
    %v2874 = vpop.f32.mrf.mxu0
    %v2875 = vpop.f32.mrf.mxu0
    %2876 = vdwg.mxu0
    %2877 = vmatprep.subr.bf16.mxu0 %v1977
    %2878 = vmatpush1.bf16.msra.mxu0 %v1976
    %2879 = vmatprep.subr.bf16.mxu0 %v1969
    %2880 = vmatpush1.bf16.msra.mxu0 %v1968
    %2881 = vmatprep.subr.bf16.mxu0 %v1961
    %2882 = vmatpush1.bf16.msra.mxu0 %v1960
    %2883 = vmatprep.subr.bf16.mxu0 %v1953
    %2884 = vmatpush1.bf16.msra.mxu0 %v1952
    %2885 = vmatprep.subr.bf16.mxu0 %v1945
    %2886 = vmatpush1.bf16.msra.mxu0 %v1944
    %2887 = vmatprep.subr.bf16.mxu0 %v1937
    %2888 = vmatpush1.bf16.msra.mxu0 %v1936
    %2889 = vmatprep.subr.bf16.mxu0 %v1929
    %2890 = vmatpush1.bf16.msra.mxu0 %v1928
    %2891 = vmatprep.subr.bf16.mxu0 %v1921
    %2892 = vmatpush1.bf16.msra.mxu0 %v1920
    %2893 = vmatprep.subr.bf16.mxu0 %v2041
    %2894 = vmatpush2.bf16.msra.mxu0 %v2040
    %2895 = vmatprep.subr.bf16.mxu0 %v2033
    %2896 = vmatpush2.bf16.msra.mxu0 %v2032
    %2897 = vmatprep.subr.bf16.mxu0 %v2025
    %2898 = vmatpush2.bf16.msra.mxu0 %v2024
    %2899 = vmatprep.subr.bf16.mxu0 %v2017
    %2900 = vmatpush2.bf16.msra.mxu0 %v2016
    %2901 = vmatprep.subr.bf16.mxu0 %v2009
    %2902 = vmatpush2.bf16.msra.mxu0 %v2008
    %2903 = vmatprep.subr.bf16.mxu0 %v2001
    %2904 = vmatpush2.bf16.msra.mxu0 %v2000
    %2905 = vmatprep.subr.bf16.mxu0 %v1993
    %2906 = vmatpush2.bf16.msra.mxu0 %v1992
    %2907 = vmatprep.subr.bf16.mxu0 %v1985
    %2908 = vmatpush2.bf16.msra.mxu0 %v1984
    %2909 = vmatprep.mubr.bf16.mxu0 %v121
    %2910 = vmatmul.mubr.bf16.gmra.mxu0 %v120
    %v2911 = vpop.f32.mrf.mxu0
    %v2912 = vadd.f32 %v2871, %v2911
    %v2913 = vpop.f32.mrf.mxu0
    %v2914 = vadd.f32 %v2873, %v2913
    %v2915 = vpop.f32.mrf.mxu0
    %v2916 = vpop.f32.mrf.mxu0
    %2917 = vdwg.mxu0
    %v2918 = vld [vmem:[#allocation7] ss:$2 sm:$0xff]
    %v2920 = vlaneseq
    %v2921 = vshrl.u32 %v2920, 7
    %v2922 = vsub.s32 0, %v2921
    %v2923 = vrot.slane %v2918, %v2922
    %v2924 = vlaneseq
    %v2925 = vshrl.u32 %v2924, 7
    %v2926 = vsub.s32 1, %v2925
    %v2927 = vrot.slane %v2918, %v2926
    %v2928 = vlaneseq
    %v2929 = vshrl.u32 %v2928, 7
    %v2930 = vsub.s32 2, %v2929
    %v2931 = vrot.slane %v2918, %v2930
    %v2932 = vlaneseq
    %v2933 = vshrl.u32 %v2932, 7
    %v2934 = vsub.s32 3, %v2933
    %v2935 = vrot.slane %v2918, %v2934
    %v2936 = vlaneseq
    %v2937 = vshrl.u32 %v2936, 7
    %v2938 = vsub.s32 4, %v2937
    %v2939 = vrot.slane %v2918, %v2938
    %v2940 = vlaneseq
    %v2941 = vshrl.u32 %v2940, 7
    %v2942 = vsub.s32 5, %v2941
    %v2943 = vrot.slane %v2918, %v2942
    %v2944 = vlaneseq
    %v2945 = vshrl.u32 %v2944, 7
    %v2946 = vsub.s32 6, %v2945
    %v2947 = vrot.slane %v2918, %v2946
    %v2948 = vlaneseq
    %v2949 = vshrl.u32 %v2948, 7
    %v2950 = vsub.s32 7, %v2949
    %v2951 = vrot.slane %v2918, %v2950
    %v2960 = vmul.f32 %v2543, %v2923
    %v2961 = vmul.f32 %v2545, %v2927
    %v2962 = vmul.f32 %v2666, %v2931
    %v2963 = vmul.f32 %v2668, %v2935
    %v2964 = vmul.f32 %v2789, %v2939
    %v2965 = vmul.f32 %v2791, %v2943
    %v2966 = vmul.f32 %v2912, %v2947
    %v2967 = vmul.f32 %v2914, %v2951
    %v2968 = vadd.f32 %v2960, %v2961
    %v2969 = vadd.f32 %v2968, %v2962
    %v2970 = vadd.f32 %v2969, %v2963
    %v2971 = vadd.f32 %v2970, %v2964
    %v2972 = vadd.f32 %v2971, %v2965
    %v2973 = vadd.f32 %v2972, %v2966
    %v2974 = vadd.f32 %v2973, %v2967
    %2975 = vadd.xlane.f32.xlu0 %v2974
    %v2976 = vpop.xlane.xlu0 %2975
    %s2977 = scalar_lea.vmem [#allocation7], 1
    %v2978 = vld [vmem:[%s2977] ss:$2 sm:$0xff]
    %v2980 = vlaneseq
    %v2981 = vshrl.u32 %v2980, 7
    %v2982 = vsub.s32 0, %v2981
    %v2983 = vrot.slane %v2978, %v2982
    %v2984 = vlaneseq
    %v2985 = vshrl.u32 %v2984, 7
    %v2986 = vsub.s32 1, %v2985
    %v2987 = vrot.slane %v2978, %v2986
    %v2988 = vlaneseq
    %v2989 = vshrl.u32 %v2988, 7
    %v2990 = vsub.s32 2, %v2989
    %v2991 = vrot.slane %v2978, %v2990
    %v2992 = vlaneseq
    %v2993 = vshrl.u32 %v2992, 7
    %v2994 = vsub.s32 3, %v2993
    %v2995 = vrot.slane %v2978, %v2994
    %v2996 = vlaneseq
    %v2997 = vshrl.u32 %v2996, 7
    %v2998 = vsub.s32 4, %v2997
    %v2999 = vrot.slane %v2978, %v2998
    %v3000 = vlaneseq
    %v3001 = vshrl.u32 %v3000, 7
    %v3002 = vsub.s32 5, %v3001
    %v3003 = vrot.slane %v2978, %v3002
    %v3004 = vlaneseq
    %v3005 = vshrl.u32 %v3004, 7
    %v3006 = vsub.s32 6, %v3005
    %v3007 = vrot.slane %v2978, %v3006
    %v3008 = vlaneseq
    %v3009 = vshrl.u32 %v3008, 7
    %v3010 = vsub.s32 7, %v3009
    %v3011 = vrot.slane %v2978, %v3010
    %v3020 = vmul.f32 %v2543, %v2983
    %v3021 = vmul.f32 %v2545, %v2987
    %v3022 = vmul.f32 %v2666, %v2991
    %v3023 = vmul.f32 %v2668, %v2995
    %v3024 = vmul.f32 %v2789, %v2999
    %v3025 = vmul.f32 %v2791, %v3003
    %v3026 = vmul.f32 %v2912, %v3007
    %v3027 = vmul.f32 %v2914, %v3011
    %v3028 = vadd.f32 %v3020, %v3021
    %v3029 = vadd.f32 %v3028, %v3022
    %v3030 = vadd.f32 %v3029, %v3023
    %v3031 = vadd.f32 %v3030, %v3024
    %v3032 = vadd.f32 %v3031, %v3025
    %v3033 = vadd.f32 %v3032, %v3026
    %v3034 = vadd.f32 %v3033, %v3027
    %3035 = vadd.xlane.f32.xlu0 %v3034
    %v3036 = vpop.xlane.xlu0 %3035
    %vm3037 = vcmask 7168
    %v3038 = vsel %vm3037, %v2976, %v3036
    %vm3039 = vcmask 15360
    %3040 = vst.msk [vmem:[%s4] sm:$0xff] %vm3039, %v3038
    // Predicated region
    $region34: #{tpu_custom_call.1} parent=1 // pred_check
      _
    $region35: #{tpu_custom_call.1} parent=1 // pred_check_branch
      %3042 = sbr.rel (0) target = $region37
    $region36: #{tpu_custom_call.1} parent=1 // pred_region
      _
    $region37: #{tpu_custom_call.1} parent=1 // pred_fallthru
      _
    // Predicated region
    $region38: #{tpu_custom_call.1} parent=1 // pred_check
      _
    $region39: #{tpu_custom_call.1} parent=1 // pred_check_branch
      %3044 = sbr.rel (0) target = $region41
    $region40: #{tpu_custom_call.1} parent=1 // pred_region
      _
    $region41: #{tpu_custom_call.1} parent=1 // pred_fallthru
      _
    %3045 = vsyncpa [#allocation3], 1
    %3046 = vsyncpa [#allocation5], 1
    %3047 = vsyncpa [#allocation8], 1

</llo_original>
